<compile_context>
chip_gen: v6e
topology: v6e:2x2x1
jax: 0.10.0
libtpu: 0.0.40
codegen_flags: <defaults>
</compile_context>

<pallas_src>
import math
from functools import partial

import jax
import jax.numpy as jnp
from jax.experimental import pallas as pl
from jax.experimental.pallas import tpu as pltpu


def _round_up(x, m):
    return ((x + m - 1) // m) * m


# ---------------- fused Pallas kernel ----------------

def _fused_kernel(*refs, num_layers, tf, n_mlp, compute_dtype):
    """refs = (x, q, qb, w0', b0', w1, b1, ..., out).

    The x block is row-major (TB, D); it is transposed once to feature-major (D, TB) so the
    batch sits on the 128-wide lane axis and every matmul / intermediate is lane-dense.

      Orthogonal:  y = Q @ x + b                      (one full-Q dot)
      Coupling:    x <- [y1 + MLP(x2); y2], with the MLP's first linear pre-folded through the
                   orthogonal so it reads the *pre*-orthogonal activation (overlaps Q @ x).
    """
    x_ref, q_ref, qb_ref = refs[0], refs[1], refs[2]
    mlp = refs[3:3 + 2 * n_mlp]
    o_ref = refs[3 + 2 * n_mlp]

    f32 = jnp.float32
    cd = compute_dtype

    # (TB, D) -> (D, TB): one XLU transpose per tile, hidden under the MXU work below.
    x = x_ref[...].astype(f32).T

    for li in range(num_layers):
        xb = x.astype(cd)                                  # MXU operand dtype (bf16 on v6e/v7x)

        # Orthogonal: one full-Q matmul, f32 accumulation.
        y = jnp.dot(q_ref[li], xb, preferred_element_type=f32) + qb_ref[li]

        # Coupling MLP.  First linear is folded through the orthogonal -> reads xb (pre-orth),
        # so it has no data dependence on `y` and overlaps the Q @ x dot.
        h = jnp.dot(mlp[0][li], xb, preferred_element_type=f32) + mlp[1][li]
        for j in range(1, n_mlp):                          # ReLU then next Linear; last has no ReLU
            h = jnp.maximum(h, 0.0)
            w, b = mlp[2 * j], mlp[2 * j + 1]
            h = jnp.dot(w[li], h.astype(cd), preferred_element_type=f32) + b[li]

        # x1 <- y1 + MLP(x2), x2 <- y2.  tf is a multiple of the f32 sublane tile (8) for
        # dim=16, so this axis-0 concat is tile-aligned (no relayout).
        x = jnp.concatenate([y[:tf, :] + h, y[tf:, :]], axis=0)

    # Final Orthogonal, then back to row-major (TB, D) for the store.
    y = jnp.dot(q_ref[num_layers], x.astype(cd), preferred_element_type=f32) + qb_ref[num_layers]
    o_ref[...] = y.T.astype(o_ref.dtype)


# ---------------- fused pallas_call wrapper ----------------

def volume_preserving_forward(x, orth, coupling, tf, *, block_b=2048, min_grid_steps=1,
                              compute_dtype=jnp.bfloat16):
    """Fused forward pass.  x: (B, D) row-major; returns (B, D).

    compute_dtype: dtype of the MXU operands (weights + activation casts); bf16 gives ~2x MXU
      throughput on v5e/v6e/v7x, all accumulation / bias / ReLU math stays float32.
    min_grid_steps: set to 2 on v7x so the "parallel" batch grid shards across its 2 TensorCores.
    """
    B, D = x.shape
    num_layers = len(coupling)
    n_mlp = len(coupling[0])
    f32 = jnp.float32

    # ---- pack parameters once (trace-time glue; frees the kernel of slicing/transposes) ----
    qs = jnp.stack([q for q, _ in orth]).astype(f32)               # (L+1, D, D);  y = Q @ x
    bs = jnp.stack([b for _, b in orth]).astype(f32)               # (L+1, D)
    qb = bs[..., None]                                             # (L+1, D, 1) broadcast on lanes

    # Fold each coupling's first linear through its layer's orthogonal:
    #   W0 @ (Q x + b)[tf:] + b0  ==  (W0 @ Q[tf:, :]) @ x  +  (W0 @ b[tf:] + b0)
    w0 = jnp.stack([coupling[li][0][0] for li in range(num_layers)]).astype(f32)  # (L, h0, D - tf)
    b0 = jnp.stack([coupling[li][0][1] for li in range(num_layers)]).astype(f32)  # (L, h0)
    q2 = qs[:num_layers, tf:, :]                                   # (L, D - tf, D)
    w0f = jnp.einsum("lhp,lpd->lhd", w0, q2)                       # (L, h0, D)
    b0f = (jnp.einsum("lhp,lp->lh", w0, bs[:num_layers, tf:]) + b0)[..., None]

    mlp_args = [w0f.astype(compute_dtype), b0f]
    for j in range(1, n_mlp):
        mlp_args.append(jnp.stack([coupling[li][j][0] for li in range(num_layers)])
                        .astype(compute_dtype))                    # (L, out_j, in_j)
        mlp_args.append(jnp.stack([coupling[li][j][1] for li in range(num_layers)])
                        .astype(f32)[..., None])                   # (L, out_j, 1)

    weight_args = [qs.astype(compute_dtype), qb] + mlp_args

    # ---- batch tiling: row-major (tb, D) blocks; tb becomes the MXU lane width in-kernel ----
    block_b = max(128, (int(block_b) // 128) * 128)                # multiple of 128, >= 128
    tb = min(block_b, _round_up(B, 128))
    if min_grid_steps > 1:                                         # v7x: shard across both TCs
        per_core = -(-_round_up(B, 128) // min_grid_steps)
        tb = min(tb, max(128, _round_up(per_core, 128)))
    Bp = _round_up(B, tb)
    x_in = x if Bp == B else jnp.pad(x, ((0, Bp - B), (0, 0)))     # pad only when B % tb != 0
    grid = (Bp // tb,)

    act_spec = pl.BlockSpec((tb, D), lambda i: (i, 0))

    def wspec(a):
        nd = a.ndim
        return pl.BlockSpec(a.shape, lambda i, nd=nd: (0,) * nd)   # weights resident across steps

    itemsize = x.dtype.itemsize
    flops = 2 * Bp * (qs.shape[0] * D * D
                      + sum(int(w.shape[0]) * int(w.shape[1]) * int(w.shape[2])
                            for w in mlp_args[0::2]))
    bytes_accessed = 2 * Bp * D * itemsize + sum(int(a.size) * a.dtype.itemsize
                                                 for a in weight_args)

    out = pl.pallas_call(
        partial(_fused_kernel, num_layers=num_layers, tf=tf, n_mlp=n_mlp,
                compute_dtype=compute_dtype),
        out_shape=jax.ShapeDtypeStruct((Bp, D), x.dtype),
        grid=grid,
        in_specs=[act_spec] + [wspec(a) for a in weight_args],
        out_specs=act_spec,
        compiler_params=pltpu.CompilerParams(
            dimension_semantics=("parallel",),
            vmem_limit_bytes=64 * 1024 * 1024,
        ),
        cost_estimate=pl.CostEstimate(flops=flops, transcendentals=0,
                                      bytes_accessed=bytes_accessed),
    )(x_in, *weight_args)

    return out if Bp == B else out[:B]


# ---------------- deterministic parameter init (mirrors nn.Module.__init__) ----------------

def init_linear(key, in_f, out_f):
    kw, kb = jax.random.split(key)
    bound = 1.0 / math.sqrt(in_f)
    w = jax.random.uniform(kw, (out_f, in_f), jnp.float32, -bound, bound)
    b = jax.random.uniform(kb, (out_f,), jnp.float32, -bound, bound)
    return w, b


def init_orthogonal(key, dim):
    kq, kb = jax.random.split(key)
    qp = jax.random.uniform(kq, (dim, dim), jnp.float32, -math.pi, math.pi)
    triu = jnp.triu(qp, k=1)
    log_rot = triu - triu.T
    # TODO(synk): torch.matrix_exp has no in-kernel Pallas equivalent; computed once here as glue.
    q = jax.scipy.linalg.expm(log_rot)
    bound = 1.0 / math.sqrt(dim)          # fan_in of the (n, n) q_params is n
    b = jax.random.uniform(kb, (dim,), jnp.float32, -bound, bound)
    return q, b


def init_params(key, dim, num_layers=4, channel_mults=(1, 4, 4, 1)):
    tf = dim // 2
    npar = dim - tf
    channels = [npar] + [int(npar * m) for m in channel_mults]
    pairs = list(zip(channels[:-1], channels[1:]))
    orth, coupling = [], []
    keys = jax.random.split(key, 2 * num_layers + 1)
    for li in range(num_layers):
        orth.append(init_orthogonal(keys[2 * li], dim))
        mk = jax.random.split(keys[2 * li + 1], len(pairs))
        mlp = []
        for j, (ci, cj) in enumerate(pairs[:-1]):        # Linear + ReLU blocks
            mlp.append(init_linear(mk[j], ci, cj))
        mlp.append(init_linear(mk[-1], pairs[-1][0], tf))  # final Linear
        coupling.append(mlp)
    orth.append(init_orthogonal(keys[-1], dim))
    return orth, coupling, tf


# ---------------- pure-JAX reference (row-major, unfused) ----------------

def volume_preserving_forward_ref(x, orth, coupling, tf):
    num_layers = len(coupling)
    for i in range(num_layers):
        q, b = orth[i]
        x = x @ q.T + b
        x1, x2 = x[:, :tf], x[:, tf:]
        h = x2
        for w, bb in coupling[i][:-1]:
            h = jnp.maximum(h @ w.T + bb, 0.0)
        w, bb = coupling[i][-1]
        x = jnp.concatenate([x1 + h @ w.T + bb, x2], axis=1)
    q, b = orth[-1]
    return x @ q.T + b


if __name__ == "__main__":
    dim, batch = 16, 8          # dim=16 -> transformed=8, mlp hidden widths = (8, 32, 32)
    key = jax.random.PRNGKey(0)
    kx, kp = jax.random.split(key)
    x = jax.random.normal(kx, (batch, dim), jnp.float32)
    orth, coupling, tf = init_params(kp, dim, num_layers=4, channel_mults=(1, 4, 4, 1))

    ref = volume_preserving_forward_ref(x, orth, coupling, tf)

    # Exact-f32 path: verifies fused kernel (single-Q orthogonal + folded first linear) tightly.
    fwd_f32 = jax.jit(partial(volume_preserving_forward, tf=tf, compute_dtype=jnp.float32))
    out_f32 = jax.block_until_ready(fwd_f32(x, orth, coupling))
    assert out_f32.shape == (batch, dim)
    assert jnp.allclose(out_f32, ref, atol=1e-3, rtol=1e-3), "f32 Pallas output mismatch"

    # Default bf16-MXU perf path (v5e/v6e/v7x): bf16 operands introduce ~1% quantization,
    # checked against the f32 reference at a correspondingly looser tolerance.
    fwd_bf16 = jax.jit(partial(volume_preserving_forward, tf=tf))
    out_bf16 = jax.block_until_ready(fwd_bf16(x, orth, coupling))
    assert out_bf16.shape == (batch, dim)
    assert bool(jnp.all(jnp.isfinite(out_bf16)))
    assert jnp.allclose(out_bf16, ref, atol=1e-1, rtol=1e-1), "bf16 Pallas output mismatch"

    print("KERNEL_OK")
</pallas_src>

<mosaic_0001>
module attributes {stable_mosaic.version = 11 : i64} {
  func.func @_fused_kernel(%arg0: i32, %arg1: memref<128x16xf32, #tpu.memory_space<vmem>>, %arg2: memref<5x16x16xf32, #tpu.memory_space<vmem>>, %arg3: memref<5x16x1xf32, #tpu.memory_space<vmem>>, %arg4: memref<4x8x16xf32, #tpu.memory_space<vmem>>, %arg5: memref<4x8x1xf32, #tpu.memory_space<vmem>>, %arg6: memref<4x32x8xf32, #tpu.memory_space<vmem>>, %arg7: memref<4x32x1xf32, #tpu.memory_space<vmem>>, %arg8: memref<4x32x32xf32, #tpu.memory_space<vmem>>, %arg9: memref<4x32x1xf32, #tpu.memory_space<vmem>>, %arg10: memref<4x8x32xf32, #tpu.memory_space<vmem>>, %arg11: memref<4x8x1xf32, #tpu.memory_space<vmem>>, %arg12: memref<128x16xf32, #tpu.memory_space<vmem>>) attributes {dimension_semantics = [#tpu.dimension_semantics<parallel>], iteration_bounds = array<i64: 1>, scalar_prefetch = 0 : i64, scratch_operands = 0 : i64, tpu.core_type = #tpu.core_type<tc>, window_params = [{transform_indices = @transform_0, window_bounds = array<i64: 128, 16>}, {pipeline_mode = #tpu.pipeline_mode<synchronous>, transform_indices = @transform_1, window_bounds = array<i64: 5, 16, 16>}, {pipeline_mode = #tpu.pipeline_mode<synchronous>, transform_indices = @transform_2, window_bounds = array<i64: 5, 16, 1>}, {pipeline_mode = #tpu.pipeline_mode<synchronous>, transform_indices = @transform_3, window_bounds = array<i64: 4, 8, 16>}, {pipeline_mode = #tpu.pipeline_mode<synchronous>, transform_indices = @transform_4, window_bounds = array<i64: 4, 8, 1>}, {pipeline_mode = #tpu.pipeline_mode<synchronous>, transform_indices = @transform_5, window_bounds = array<i64: 4, 32, 8>}, {pipeline_mode = #tpu.pipeline_mode<synchronous>, transform_indices = @transform_6, window_bounds = array<i64: 4, 32, 1>}, {pipeline_mode = #tpu.pipeline_mode<synchronous>, transform_indices = @transform_7, window_bounds = array<i64: 4, 32, 32>}, {pipeline_mode = #tpu.pipeline_mode<synchronous>, transform_indices = @transform_8, window_bounds = array<i64: 4, 32, 1>}, {pipeline_mode = #tpu.pipeline_mode<synchronous>, transform_indices = @transform_9, window_bounds = array<i64: 4, 8, 32>}, {pipeline_mode = #tpu.pipeline_mode<synchronous>, transform_indices = @transform_10, window_bounds = array<i64: 4, 8, 1>}, {transform_indices = @transform_11, window_bounds = array<i64: 128, 16>}]} {
    %c0 = arith.constant 0 : index
    %c0_0 = arith.constant 0 : index
    %0 = vector.load %arg1[%c0, %c0_0] : memref<128x16xf32, #tpu.memory_space<vmem>>, vector<128x16xf32>
    %1 = tpu.transpose %0, [1, 0] : vector<128x16xf32> -> vector<16x128xf32>
    %c0_1 = arith.constant 0 : index
    %c0_2 = arith.constant 0 : index
    %c0_3 = arith.constant 0 : index
    %2 = vector.load %arg2[%c0_1, %c0_2, %c0_3] : memref<5x16x16xf32, #tpu.memory_space<vmem>>, vector<1x16x16xf32>
    %3 = vector.shape_cast %2 : vector<1x16x16xf32> to vector<16x16xf32>
    %cst = arith.constant dense<0.000000e+00> : vector<16x128xf32>
    %4 = tpu.matmul %3, %1, %cst {dimension_numbers = #tpu.dot_dimension_numbers<[1], [0], [0], [1], [0, 0, 1, 1], [], []>} : vector<16x16xf32>, vector<16x128xf32>, vector<16x128xf32> -> vector<16x128xf32>
    %c0_4 = arith.constant 0 : index
    %c0_5 = arith.constant 0 : index
    %c0_6 = arith.constant 0 : index
    %5 = vector.load %arg3[%c0_4, %c0_5, %c0_6] : memref<5x16x1xf32, #tpu.memory_space<vmem>>, vector<1x16x1xf32>
    %6 = vector.shape_cast %5 : vector<1x16x1xf32> to vector<16x1xf32>
    %7 = vector.broadcast %6 : vector<16x1xf32> to vector<16x128xf32>
    %8 = arith.addf %4, %7 : vector<16x128xf32>
    %c0_7 = arith.constant 0 : index
    %c0_8 = arith.constant 0 : index
    %c0_9 = arith.constant 0 : index
    %9 = vector.load %arg4[%c0_7, %c0_8, %c0_9] : memref<4x8x16xf32, #tpu.memory_space<vmem>>, vector<1x8x16xf32>
    %10 = vector.shape_cast %9 : vector<1x8x16xf32> to vector<8x16xf32>
    %cst_10 = arith.constant dense<0.000000e+00> : vector<8x128xf32>
    %11 = tpu.matmul %10, %1, %cst_10 {dimension_numbers = #tpu.dot_dimension_numbers<[1], [0], [0], [1], [0, 0, 1, 1], [], []>} : vector<8x16xf32>, vector<16x128xf32>, vector<8x128xf32> -> vector<8x128xf32>
    %c0_11 = arith.constant 0 : index
    %c0_12 = arith.constant 0 : index
    %c0_13 = arith.constant 0 : index
    %12 = vector.load %arg5[%c0_11, %c0_12, %c0_13] : memref<4x8x1xf32, #tpu.memory_space<vmem>>, vector<1x8x1xf32>
    %13 = vector.shape_cast %12 : vector<1x8x1xf32> to vector<8x1xf32>
    %14 = vector.broadcast %13 : vector<8x1xf32> to vector<8x128xf32>
    %15 = arith.addf %11, %14 : vector<8x128xf32>
    %cst_14 = arith.constant 0.000000e+00 : f32
    %16 = vector.broadcast %cst_14 : f32 to vector<8x128xf32>
    %17 = arith.maximumf %15, %16 : vector<8x128xf32>
    %c0_15 = arith.constant 0 : index
    %c0_16 = arith.constant 0 : index
    %c0_17 = arith.constant 0 : index
    %18 = vector.load %arg6[%c0_15, %c0_16, %c0_17] : memref<4x32x8xf32, #tpu.memory_space<vmem>>, vector<1x32x8xf32>
    %19 = vector.shape_cast %18 : vector<1x32x8xf32> to vector<32x8xf32>
    %cst_18 = arith.constant dense<0.000000e+00> : vector<32x128xf32>
    %20 = tpu.matmul %19, %17, %cst_18 {dimension_numbers = #tpu.dot_dimension_numbers<[1], [0], [0], [1], [0, 0, 1, 1], [], []>} : vector<32x8xf32>, vector<8x128xf32>, vector<32x128xf32> -> vector<32x128xf32>
    %c0_19 = arith.constant 0 : index
    %c0_20 = arith.constant 0 : index
    %c0_21 = arith.constant 0 : index
    %21 = vector.load %arg7[%c0_19, %c0_20, %c0_21] : memref<4x32x1xf32, #tpu.memory_space<vmem>>, vector<1x32x1xf32>
    %22 = vector.shape_cast %21 : vector<1x32x1xf32> to vector<32x1xf32>
    %23 = vector.broadcast %22 : vector<32x1xf32> to vector<32x128xf32>
    %24 = arith.addf %20, %23 : vector<32x128xf32>
    %cst_22 = arith.constant 0.000000e+00 : f32
    %25 = vector.broadcast %cst_22 : f32 to vector<32x128xf32>
    %26 = arith.maximumf %24, %25 : vector<32x128xf32>
    %c0_23 = arith.constant 0 : index
    %c0_24 = arith.constant 0 : index
    %c0_25 = arith.constant 0 : index
    %27 = vector.load %arg8[%c0_23, %c0_24, %c0_25] : memref<4x32x32xf32, #tpu.memory_space<vmem>>, vector<1x32x32xf32>
    %28 = vector.shape_cast %27 : vector<1x32x32xf32> to vector<32x32xf32>
    %cst_26 = arith.constant dense<0.000000e+00> : vector<32x128xf32>
    %29 = tpu.matmul %28, %26, %cst_26 {dimension_numbers = #tpu.dot_dimension_numbers<[1], [0], [0], [1], [0, 0, 1, 1], [], []>} : vector<32x32xf32>, vector<32x128xf32>, vector<32x128xf32> -> vector<32x128xf32>
    %c0_27 = arith.constant 0 : index
    %c0_28 = arith.constant 0 : index
    %c0_29 = arith.constant 0 : index
    %30 = vector.load %arg9[%c0_27, %c0_28, %c0_29] : memref<4x32x1xf32, #tpu.memory_space<vmem>>, vector<1x32x1xf32>
    %31 = vector.shape_cast %30 : vector<1x32x1xf32> to vector<32x1xf32>
    %32 = vector.broadcast %31 : vector<32x1xf32> to vector<32x128xf32>
    %33 = arith.addf %29, %32 : vector<32x128xf32>
    %cst_30 = arith.constant 0.000000e+00 : f32
    %34 = vector.broadcast %cst_30 : f32 to vector<32x128xf32>
    %35 = arith.maximumf %33, %34 : vector<32x128xf32>
    %c0_31 = arith.constant 0 : index
    %c0_32 = arith.constant 0 : index
    %c0_33 = arith.constant 0 : index
    %36 = vector.load %arg10[%c0_31, %c0_32, %c0_33] : memref<4x8x32xf32, #tpu.memory_space<vmem>>, vector<1x8x32xf32>
    %37 = vector.shape_cast %36 : vector<1x8x32xf32> to vector<8x32xf32>
    %cst_34 = arith.constant dense<0.000000e+00> : vector<8x128xf32>
    %38 = tpu.matmul %37, %35, %cst_34 {dimension_numbers = #tpu.dot_dimension_numbers<[1], [0], [0], [1], [0, 0, 1, 1], [], []>} : vector<8x32xf32>, vector<32x128xf32>, vector<8x128xf32> -> vector<8x128xf32>
    %c0_35 = arith.constant 0 : index
    %c0_36 = arith.constant 0 : index
    %c0_37 = arith.constant 0 : index
    %39 = vector.load %arg11[%c0_35, %c0_36, %c0_37] : memref<4x8x1xf32, #tpu.memory_space<vmem>>, vector<1x8x1xf32>
    %40 = vector.shape_cast %39 : vector<1x8x1xf32> to vector<8x1xf32>
    %41 = vector.broadcast %40 : vector<8x1xf32> to vector<8x128xf32>
    %42 = arith.addf %38, %41 : vector<8x128xf32>
    %43 = vector.extract_strided_slice %8 {offsets = [0, 0], sizes = [8, 128], strides = [1, 1]} : vector<16x128xf32> to vector<8x128xf32>
    %44 = arith.addf %43, %42 : vector<8x128xf32>
    %45 = vector.extract_strided_slice %8 {offsets = [8, 0], sizes = [8, 128], strides = [1, 1]} : vector<16x128xf32> to vector<8x128xf32>
    %46 = tpu.concatenate %44, %45 in 0 : vector<8x128xf32>, vector<8x128xf32> -> vector<16x128xf32>
    %c1 = arith.constant 1 : index
    %c0_38 = arith.constant 0 : index
    %c0_39 = arith.constant 0 : index
    %47 = vector.load %arg2[%c1, %c0_38, %c0_39] : memref<5x16x16xf32, #tpu.memory_space<vmem>>, vector<1x16x16xf32>
    %48 = vector.shape_cast %47 : vector<1x16x16xf32> to vector<16x16xf32>
    %cst_40 = arith.constant dense<0.000000e+00> : vector<16x128xf32>
    %49 = tpu.matmul %48, %46, %cst_40 {dimension_numbers = #tpu.dot_dimension_numbers<[1], [0], [0], [1], [0, 0, 1, 1], [], []>} : vector<16x16xf32>, vector<16x128xf32>, vector<16x128xf32> -> vector<16x128xf32>
    %c1_41 = arith.constant 1 : index
    %c0_42 = arith.constant 0 : index
    %c0_43 = arith.constant 0 : index
    %50 = vector.load %arg3[%c1_41, %c0_42, %c0_43] : memref<5x16x1xf32, #tpu.memory_space<vmem>>, vector<1x16x1xf32>
    %51 = vector.shape_cast %50 : vector<1x16x1xf32> to vector<16x1xf32>
    %52 = vector.broadcast %51 : vector<16x1xf32> to vector<16x128xf32>
    %53 = arith.addf %49, %52 : vector<16x128xf32>
    %c1_44 = arith.constant 1 : index
    %c0_45 = arith.constant 0 : index
    %c0_46 = arith.constant 0 : index
    %54 = vector.load %arg4[%c1_44, %c0_45, %c0_46] : memref<4x8x16xf32, #tpu.memory_space<vmem>>, vector<1x8x16xf32>
    %55 = vector.shape_cast %54 : vector<1x8x16xf32> to vector<8x16xf32>
    %cst_47 = arith.constant dense<0.000000e+00> : vector<8x128xf32>
    %56 = tpu.matmul %55, %46, %cst_47 {dimension_numbers = #tpu.dot_dimension_numbers<[1], [0], [0], [1], [0, 0, 1, 1], [], []>} : vector<8x16xf32>, vector<16x128xf32>, vector<8x128xf32> -> vector<8x128xf32>
    %c1_48 = arith.constant 1 : index
    %c0_49 = arith.constant 0 : index
    %c0_50 = arith.constant 0 : index
    %57 = vector.load %arg5[%c1_48, %c0_49, %c0_50] : memref<4x8x1xf32, #tpu.memory_space<vmem>>, vector<1x8x1xf32>
    %58 = vector.shape_cast %57 : vector<1x8x1xf32> to vector<8x1xf32>
    %59 = vector.broadcast %58 : vector<8x1xf32> to vector<8x128xf32>
    %60 = arith.addf %56, %59 : vector<8x128xf32>
    %cst_51 = arith.constant 0.000000e+00 : f32
    %61 = vector.broadcast %cst_51 : f32 to vector<8x128xf32>
    %62 = arith.maximumf %60, %61 : vector<8x128xf32>
    %c1_52 = arith.constant 1 : index
    %c0_53 = arith.constant 0 : index
    %c0_54 = arith.constant 0 : index
    %63 = vector.load %arg6[%c1_52, %c0_53, %c0_54] : memref<4x32x8xf32, #tpu.memory_space<vmem>>, vector<1x32x8xf32>
    %64 = vector.shape_cast %63 : vector<1x32x8xf32> to vector<32x8xf32>
    %cst_55 = arith.constant dense<0.000000e+00> : vector<32x128xf32>
    %65 = tpu.matmul %64, %62, %cst_55 {dimension_numbers = #tpu.dot_dimension_numbers<[1], [0], [0], [1], [0, 0, 1, 1], [], []>} : vector<32x8xf32>, vector<8x128xf32>, vector<32x128xf32> -> vector<32x128xf32>
    %c1_56 = arith.constant 1 : index
    %c0_57 = arith.constant 0 : index
    %c0_58 = arith.constant 0 : index
    %66 = vector.load %arg7[%c1_56, %c0_57, %c0_58] : memref<4x32x1xf32, #tpu.memory_space<vmem>>, vector<1x32x1xf32>
    %67 = vector.shape_cast %66 : vector<1x32x1xf32> to vector<32x1xf32>
    %68 = vector.broadcast %67 : vector<32x1xf32> to vector<32x128xf32>
    %69 = arith.addf %65, %68 : vector<32x128xf32>
    %cst_59 = arith.constant 0.000000e+00 : f32
    %70 = vector.broadcast %cst_59 : f32 to vector<32x128xf32>
    %71 = arith.maximumf %69, %70 : vector<32x128xf32>
    %c1_60 = arith.constant 1 : index
    %c0_61 = arith.constant 0 : index
    %c0_62 = arith.constant 0 : index
    %72 = vector.load %arg8[%c1_60, %c0_61, %c0_62] : memref<4x32x32xf32, #tpu.memory_space<vmem>>, vector<1x32x32xf32>
    %73 = vector.shape_cast %72 : vector<1x32x32xf32> to vector<32x32xf32>
    %cst_63 = arith.constant dense<0.000000e+00> : vector<32x128xf32>
    %74 = tpu.matmul %73, %71, %cst_63 {dimension_numbers = #tpu.dot_dimension_numbers<[1], [0], [0], [1], [0, 0, 1, 1], [], []>} : vector<32x32xf32>, vector<32x128xf32>, vector<32x128xf32> -> vector<32x128xf32>
    %c1_64 = arith.constant 1 : index
    %c0_65 = arith.constant 0 : index
    %c0_66 = arith.constant 0 : index
    %75 = vector.load %arg9[%c1_64, %c0_65, %c0_66] : memref<4x32x1xf32, #tpu.memory_space<vmem>>, vector<1x32x1xf32>
    %76 = vector.shape_cast %75 : vector<1x32x1xf32> to vector<32x1xf32>
    %77 = vector.broadcast %76 : vector<32x1xf32> to vector<32x128xf32>
    %78 = arith.addf %74, %77 : vector<32x128xf32>
    %cst_67 = arith.constant 0.000000e+00 : f32
    %79 = vector.broadcast %cst_67 : f32 to vector<32x128xf32>
    %80 = arith.maximumf %78, %79 : vector<32x128xf32>
    %c1_68 = arith.constant 1 : index
    %c0_69 = arith.constant 0 : index
    %c0_70 = arith.constant 0 : index
    %81 = vector.load %arg10[%c1_68, %c0_69, %c0_70] : memref<4x8x32xf32, #tpu.memory_space<vmem>>, vector<1x8x32xf32>
    %82 = vector.shape_cast %81 : vector<1x8x32xf32> to vector<8x32xf32>
    %cst_71 = arith.constant dense<0.000000e+00> : vector<8x128xf32>
    %83 = tpu.matmul %82, %80, %cst_71 {dimension_numbers = #tpu.dot_dimension_numbers<[1], [0], [0], [1], [0, 0, 1, 1], [], []>} : vector<8x32xf32>, vector<32x128xf32>, vector<8x128xf32> -> vector<8x128xf32>
    %c1_72 = arith.constant 1 : index
    %c0_73 = arith.constant 0 : index
    %c0_74 = arith.constant 0 : index
    %84 = vector.load %arg11[%c1_72, %c0_73, %c0_74] : memref<4x8x1xf32, #tpu.memory_space<vmem>>, vector<1x8x1xf32>
    %85 = vector.shape_cast %84 : vector<1x8x1xf32> to vector<8x1xf32>
    %86 = vector.broadcast %85 : vector<8x1xf32> to vector<8x128xf32>
    %87 = arith.addf %83, %86 : vector<8x128xf32>
    %88 = vector.extract_strided_slice %53 {offsets = [0, 0], sizes = [8, 128], strides = [1, 1]} : vector<16x128xf32> to vector<8x128xf32>
    %89 = arith.addf %88, %87 : vector<8x128xf32>
    %90 = vector.extract_strided_slice %53 {offsets = [8, 0], sizes = [8, 128], strides = [1, 1]} : vector<16x128xf32> to vector<8x128xf32>
    %91 = tpu.concatenate %89, %90 in 0 : vector<8x128xf32>, vector<8x128xf32> -> vector<16x128xf32>
    %c2 = arith.constant 2 : index
    %c0_75 = arith.constant 0 : index
    %c0_76 = arith.constant 0 : index
    %92 = vector.load %arg2[%c2, %c0_75, %c0_76] : memref<5x16x16xf32, #tpu.memory_space<vmem>>, vector<1x16x16xf32>
    %93 = vector.shape_cast %92 : vector<1x16x16xf32> to vector<16x16xf32>
    %cst_77 = arith.constant dense<0.000000e+00> : vector<16x128xf32>
    %94 = tpu.matmul %93, %91, %cst_77 {dimension_numbers = #tpu.dot_dimension_numbers<[1], [0], [0], [1], [0, 0, 1, 1], [], []>} : vector<16x16xf32>, vector<16x128xf32>, vector<16x128xf32> -> vector<16x128xf32>
    %c2_78 = arith.constant 2 : index
    %c0_79 = arith.constant 0 : index
    %c0_80 = arith.constant 0 : index
    %95 = vector.load %arg3[%c2_78, %c0_79, %c0_80] : memref<5x16x1xf32, #tpu.memory_space<vmem>>, vector<1x16x1xf32>
    %96 = vector.shape_cast %95 : vector<1x16x1xf32> to vector<16x1xf32>
    %97 = vector.broadcast %96 : vector<16x1xf32> to vector<16x128xf32>
    %98 = arith.addf %94, %97 : vector<16x128xf32>
    %c2_81 = arith.constant 2 : index
    %c0_82 = arith.constant 0 : index
    %c0_83 = arith.constant 0 : index
    %99 = vector.load %arg4[%c2_81, %c0_82, %c0_83] : memref<4x8x16xf32, #tpu.memory_space<vmem>>, vector<1x8x16xf32>
    %100 = vector.shape_cast %99 : vector<1x8x16xf32> to vector<8x16xf32>
    %cst_84 = arith.constant dense<0.000000e+00> : vector<8x128xf32>
    %101 = tpu.matmul %100, %91, %cst_84 {dimension_numbers = #tpu.dot_dimension_numbers<[1], [0], [0], [1], [0, 0, 1, 1], [], []>} : vector<8x16xf32>, vector<16x128xf32>, vector<8x128xf32> -> vector<8x128xf32>
    %c2_85 = arith.constant 2 : index
    %c0_86 = arith.constant 0 : index
    %c0_87 = arith.constant 0 : index
    %102 = vector.load %arg5[%c2_85, %c0_86, %c0_87] : memref<4x8x1xf32, #tpu.memory_space<vmem>>, vector<1x8x1xf32>
    %103 = vector.shape_cast %102 : vector<1x8x1xf32> to vector<8x1xf32>
    %104 = vector.broadcast %103 : vector<8x1xf32> to vector<8x128xf32>
    %105 = arith.addf %101, %104 : vector<8x128xf32>
    %cst_88 = arith.constant 0.000000e+00 : f32
    %106 = vector.broadcast %cst_88 : f32 to vector<8x128xf32>
    %107 = arith.maximumf %105, %106 : vector<8x128xf32>
    %c2_89 = arith.constant 2 : index
    %c0_90 = arith.constant 0 : index
    %c0_91 = arith.constant 0 : index
    %108 = vector.load %arg6[%c2_89, %c0_90, %c0_91] : memref<4x32x8xf32, #tpu.memory_space<vmem>>, vector<1x32x8xf32>
    %109 = vector.shape_cast %108 : vector<1x32x8xf32> to vector<32x8xf32>
    %cst_92 = arith.constant dense<0.000000e+00> : vector<32x128xf32>
    %110 = tpu.matmul %109, %107, %cst_92 {dimension_numbers = #tpu.dot_dimension_numbers<[1], [0], [0], [1], [0, 0, 1, 1], [], []>} : vector<32x8xf32>, vector<8x128xf32>, vector<32x128xf32> -> vector<32x128xf32>
    %c2_93 = arith.constant 2 : index
    %c0_94 = arith.constant 0 : index
    %c0_95 = arith.constant 0 : index
    %111 = vector.load %arg7[%c2_93, %c0_94, %c0_95] : memref<4x32x1xf32, #tpu.memory_space<vmem>>, vector<1x32x1xf32>
    %112 = vector.shape_cast %111 : vector<1x32x1xf32> to vector<32x1xf32>
    %113 = vector.broadcast %112 : vector<32x1xf32> to vector<32x128xf32>
    %114 = arith.addf %110, %113 : vector<32x128xf32>
    %cst_96 = arith.constant 0.000000e+00 : f32
    %115 = vector.broadcast %cst_96 : f32 to vector<32x128xf32>
    %116 = arith.maximumf %114, %115 : vector<32x128xf32>
    %c2_97 = arith.constant 2 : index
    %c0_98 = arith.constant 0 : index
    %c0_99 = arith.constant 0 : index
    %117 = vector.load %arg8[%c2_97, %c0_98, %c0_99] : memref<4x32x32xf32, #tpu.memory_space<vmem>>, vector<1x32x32xf32>
    %118 = vector.shape_cast %117 : vector<1x32x32xf32> to vector<32x32xf32>
    %cst_100 = arith.constant dense<0.000000e+00> : vector<32x128xf32>
    %119 = tpu.matmul %118, %116, %cst_100 {dimension_numbers = #tpu.dot_dimension_numbers<[1], [0], [0], [1], [0, 0, 1, 1], [], []>} : vector<32x32xf32>, vector<32x128xf32>, vector<32x128xf32> -> vector<32x128xf32>
    %c2_101 = arith.constant 2 : index
    %c0_102 = arith.constant 0 : index
    %c0_103 = arith.constant 0 : index
    %120 = vector.load %arg9[%c2_101, %c0_102, %c0_103] : memref<4x32x1xf32, #tpu.memory_space<vmem>>, vector<1x32x1xf32>
    %121 = vector.shape_cast %120 : vector<1x32x1xf32> to vector<32x1xf32>
    %122 = vector.broadcast %121 : vector<32x1xf32> to vector<32x128xf32>
    %123 = arith.addf %119, %122 : vector<32x128xf32>
    %cst_104 = arith.constant 0.000000e+00 : f32
    %124 = vector.broadcast %cst_104 : f32 to vector<32x128xf32>
    %125 = arith.maximumf %123, %124 : vector<32x128xf32>
    %c2_105 = arith.constant 2 : index
    %c0_106 = arith.constant 0 : index
    %c0_107 = arith.constant 0 : index
    %126 = vector.load %arg10[%c2_105, %c0_106, %c0_107] : memref<4x8x32xf32, #tpu.memory_space<vmem>>, vector<1x8x32xf32>
    %127 = vector.shape_cast %126 : vector<1x8x32xf32> to vector<8x32xf32>
    %cst_108 = arith.constant dense<0.000000e+00> : vector<8x128xf32>
    %128 = tpu.matmul %127, %125, %cst_108 {dimension_numbers = #tpu.dot_dimension_numbers<[1], [0], [0], [1], [0, 0, 1, 1], [], []>} : vector<8x32xf32>, vector<32x128xf32>, vector<8x128xf32> -> vector<8x128xf32>
    %c2_109 = arith.constant 2 : index
    %c0_110 = arith.constant 0 : index
    %c0_111 = arith.constant 0 : index
    %129 = vector.load %arg11[%c2_109, %c0_110, %c0_111] : memref<4x8x1xf32, #tpu.memory_space<vmem>>, vector<1x8x1xf32>
    %130 = vector.shape_cast %129 : vector<1x8x1xf32> to vector<8x1xf32>
    %131 = vector.broadcast %130 : vector<8x1xf32> to vector<8x128xf32>
    %132 = arith.addf %128, %131 : vector<8x128xf32>
    %133 = vector.extract_strided_slice %98 {offsets = [0, 0], sizes = [8, 128], strides = [1, 1]} : vector<16x128xf32> to vector<8x128xf32>
    %134 = arith.addf %133, %132 : vector<8x128xf32>
    %135 = vector.extract_strided_slice %98 {offsets = [8, 0], sizes = [8, 128], strides = [1, 1]} : vector<16x128xf32> to vector<8x128xf32>
    %136 = tpu.concatenate %134, %135 in 0 : vector<8x128xf32>, vector<8x128xf32> -> vector<16x128xf32>
    %c3 = arith.constant 3 : index
    %c0_112 = arith.constant 0 : index
    %c0_113 = arith.constant 0 : index
    %137 = vector.load %arg2[%c3, %c0_112, %c0_113] : memref<5x16x16xf32, #tpu.memory_space<vmem>>, vector<1x16x16xf32>
    %138 = vector.shape_cast %137 : vector<1x16x16xf32> to vector<16x16xf32>
    %cst_114 = arith.constant dense<0.000000e+00> : vector<16x128xf32>
    %139 = tpu.matmul %138, %136, %cst_114 {dimension_numbers = #tpu.dot_dimension_numbers<[1], [0], [0], [1], [0, 0, 1, 1], [], []>} : vector<16x16xf32>, vector<16x128xf32>, vector<16x128xf32> -> vector<16x128xf32>
    %c3_115 = arith.constant 3 : index
    %c0_116 = arith.constant 0 : index
    %c0_117 = arith.constant 0 : index
    %140 = vector.load %arg3[%c3_115, %c0_116, %c0_117] : memref<5x16x1xf32, #tpu.memory_space<vmem>>, vector<1x16x1xf32>
    %141 = vector.shape_cast %140 : vector<1x16x1xf32> to vector<16x1xf32>
    %142 = vector.broadcast %141 : vector<16x1xf32> to vector<16x128xf32>
    %143 = arith.addf %139, %142 : vector<16x128xf32>
    %c3_118 = arith.constant 3 : index
    %c0_119 = arith.constant 0 : index
    %c0_120 = arith.constant 0 : index
    %144 = vector.load %arg4[%c3_118, %c0_119, %c0_120] : memref<4x8x16xf32, #tpu.memory_space<vmem>>, vector<1x8x16xf32>
    %145 = vector.shape_cast %144 : vector<1x8x16xf32> to vector<8x16xf32>
    %cst_121 = arith.constant dense<0.000000e+00> : vector<8x128xf32>
    %146 = tpu.matmul %145, %136, %cst_121 {dimension_numbers = #tpu.dot_dimension_numbers<[1], [0], [0], [1], [0, 0, 1, 1], [], []>} : vector<8x16xf32>, vector<16x128xf32>, vector<8x128xf32> -> vector<8x128xf32>
    %c3_122 = arith.constant 3 : index
    %c0_123 = arith.constant 0 : index
    %c0_124 = arith.constant 0 : index
    %147 = vector.load %arg5[%c3_122, %c0_123, %c0_124] : memref<4x8x1xf32, #tpu.memory_space<vmem>>, vector<1x8x1xf32>
    %148 = vector.shape_cast %147 : vector<1x8x1xf32> to vector<8x1xf32>
    %149 = vector.broadcast %148 : vector<8x1xf32> to vector<8x128xf32>
    %150 = arith.addf %146, %149 : vector<8x128xf32>
    %cst_125 = arith.constant 0.000000e+00 : f32
    %151 = vector.broadcast %cst_125 : f32 to vector<8x128xf32>
    %152 = arith.maximumf %150, %151 : vector<8x128xf32>
    %c3_126 = arith.constant 3 : index
    %c0_127 = arith.constant 0 : index
    %c0_128 = arith.constant 0 : index
    %153 = vector.load %arg6[%c3_126, %c0_127, %c0_128] : memref<4x32x8xf32, #tpu.memory_space<vmem>>, vector<1x32x8xf32>
    %154 = vector.shape_cast %153 : vector<1x32x8xf32> to vector<32x8xf32>
    %cst_129 = arith.constant dense<0.000000e+00> : vector<32x128xf32>
    %155 = tpu.matmul %154, %152, %cst_129 {dimension_numbers = #tpu.dot_dimension_numbers<[1], [0], [0], [1], [0, 0, 1, 1], [], []>} : vector<32x8xf32>, vector<8x128xf32>, vector<32x128xf32> -> vector<32x128xf32>
    %c3_130 = arith.constant 3 : index
    %c0_131 = arith.constant 0 : index
    %c0_132 = arith.constant 0 : index
    %156 = vector.load %arg7[%c3_130, %c0_131, %c0_132] : memref<4x32x1xf32, #tpu.memory_space<vmem>>, vector<1x32x1xf32>
    %157 = vector.shape_cast %156 : vector<1x32x1xf32> to vector<32x1xf32>
    %158 = vector.broadcast %157 : vector<32x1xf32> to vector<32x128xf32>
    %159 = arith.addf %155, %158 : vector<32x128xf32>
    %cst_133 = arith.constant 0.000000e+00 : f32
    %160 = vector.broadcast %cst_133 : f32 to vector<32x128xf32>
    %161 = arith.maximumf %159, %160 : vector<32x128xf32>
    %c3_134 = arith.constant 3 : index
    %c0_135 = arith.constant 0 : index
    %c0_136 = arith.constant 0 : index
    %162 = vector.load %arg8[%c3_134, %c0_135, %c0_136] : memref<4x32x32xf32, #tpu.memory_space<vmem>>, vector<1x32x32xf32>
    %163 = vector.shape_cast %162 : vector<1x32x32xf32> to vector<32x32xf32>
    %cst_137 = arith.constant dense<0.000000e+00> : vector<32x128xf32>
    %164 = tpu.matmul %163, %161, %cst_137 {dimension_numbers = #tpu.dot_dimension_numbers<[1], [0], [0], [1], [0, 0, 1, 1], [], []>} : vector<32x32xf32>, vector<32x128xf32>, vector<32x128xf32> -> vector<32x128xf32>
    %c3_138 = arith.constant 3 : index
    %c0_139 = arith.constant 0 : index
    %c0_140 = arith.constant 0 : index
    %165 = vector.load %arg9[%c3_138, %c0_139, %c0_140] : memref<4x32x1xf32, #tpu.memory_space<vmem>>, vector<1x32x1xf32>
    %166 = vector.shape_cast %165 : vector<1x32x1xf32> to vector<32x1xf32>
    %167 = vector.broadcast %166 : vector<32x1xf32> to vector<32x128xf32>
    %168 = arith.addf %164, %167 : vector<32x128xf32>
    %cst_141 = arith.constant 0.000000e+00 : f32
    %169 = vector.broadcast %cst_141 : f32 to vector<32x128xf32>
    %170 = arith.maximumf %168, %169 : vector<32x128xf32>
    %c3_142 = arith.constant 3 : index
    %c0_143 = arith.constant 0 : index
    %c0_144 = arith.constant 0 : index
    %171 = vector.load %arg10[%c3_142, %c0_143, %c0_144] : memref<4x8x32xf32, #tpu.memory_space<vmem>>, vector<1x8x32xf32>
    %172 = vector.shape_cast %171 : vector<1x8x32xf32> to vector<8x32xf32>
    %cst_145 = arith.constant dense<0.000000e+00> : vector<8x128xf32>
    %173 = tpu.matmul %172, %170, %cst_145 {dimension_numbers = #tpu.dot_dimension_numbers<[1], [0], [0], [1], [0, 0, 1, 1], [], []>} : vector<8x32xf32>, vector<32x128xf32>, vector<8x128xf32> -> vector<8x128xf32>
    %c3_146 = arith.constant 3 : index
    %c0_147 = arith.constant 0 : index
    %c0_148 = arith.constant 0 : index
    %174 = vector.load %arg11[%c3_146, %c0_147, %c0_148] : memref<4x8x1xf32, #tpu.memory_space<vmem>>, vector<1x8x1xf32>
    %175 = vector.shape_cast %174 : vector<1x8x1xf32> to vector<8x1xf32>
    %176 = vector.broadcast %175 : vector<8x1xf32> to vector<8x128xf32>
    %177 = arith.addf %173, %176 : vector<8x128xf32>
    %178 = vector.extract_strided_slice %143 {offsets = [0, 0], sizes = [8, 128], strides = [1, 1]} : vector<16x128xf32> to vector<8x128xf32>
    %179 = arith.addf %178, %177 : vector<8x128xf32>
    %180 = vector.extract_strided_slice %143 {offsets = [8, 0], sizes = [8, 128], strides = [1, 1]} : vector<16x128xf32> to vector<8x128xf32>
    %181 = tpu.concatenate %179, %180 in 0 : vector<8x128xf32>, vector<8x128xf32> -> vector<16x128xf32>
    %c4 = arith.constant 4 : index
    %c0_149 = arith.constant 0 : index
    %c0_150 = arith.constant 0 : index
    %182 = vector.load %arg2[%c4, %c0_149, %c0_150] : memref<5x16x16xf32, #tpu.memory_space<vmem>>, vector<1x16x16xf32>
    %183 = vector.shape_cast %182 : vector<1x16x16xf32> to vector<16x16xf32>
    %cst_151 = arith.constant dense<0.000000e+00> : vector<16x128xf32>
    %184 = tpu.matmul %183, %181, %cst_151 {dimension_numbers = #tpu.dot_dimension_numbers<[1], [0], [0], [1], [0, 0, 1, 1], [], []>} : vector<16x16xf32>, vector<16x128xf32>, vector<16x128xf32> -> vector<16x128xf32>
    %c4_152 = arith.constant 4 : index
    %c0_153 = arith.constant 0 : index
    %c0_154 = arith.constant 0 : index
    %185 = vector.load %arg3[%c4_152, %c0_153, %c0_154] : memref<5x16x1xf32, #tpu.memory_space<vmem>>, vector<1x16x1xf32>
    %186 = vector.shape_cast %185 : vector<1x16x1xf32> to vector<16x1xf32>
    %187 = vector.broadcast %186 : vector<16x1xf32> to vector<16x128xf32>
    %188 = arith.addf %184, %187 : vector<16x128xf32>
    %189 = tpu.transpose %188, [1, 0] : vector<16x128xf32> -> vector<128x16xf32>
    %c0_155 = arith.constant 0 : index
    %c0_156 = arith.constant 0 : index
    %190 = vector.load %arg12[%c0_155, %c0_156] : memref<128x16xf32, #tpu.memory_space<vmem>>, vector<128x16xf32>
    tpu.vector_store %arg12[%c0_155, %c0_156], %189 {strides = array<i32>} : memref<128x16xf32, #tpu.memory_space<vmem>>, vector<128x16xf32>,
    return
  }
  func.func @transform_0(%arg0: i32) -> (i32, i32) {
    %c0_i32 = arith.constant 0 : i32
    %c0_i32_0 = arith.constant 0 : i32
    return %arg0, %c0_i32 : i32, i32
  }
  func.func @transform_1(%arg0: i32) -> (i32, i32, i32) {
    %c0_i32 = arith.constant 0 : i32
    %c0_i32_0 = arith.constant 0 : i32
    %c0_i32_1 = arith.constant 0 : i32
    %c0_i32_2 = arith.constant 0 : i32
    return %c0_i32, %c0_i32_0, %c0_i32_1 : i32, i32, i32
  }
  func.func @transform_2(%arg0: i32) -> (i32, i32, i32) {
    %c0_i32 = arith.constant 0 : i32
    %c0_i32_0 = arith.constant 0 : i32
    %c0_i32_1 = arith.constant 0 : i32
    %c0_i32_2 = arith.constant 0 : i32
    return %c0_i32, %c0_i32_0, %c0_i32_1 : i32, i32, i32
  }
  func.func @transform_3(%arg0: i32) -> (i32, i32, i32) {
    %c0_i32 = arith.constant 0 : i32
    %c0_i32_0 = arith.constant 0 : i32
    %c0_i32_1 = arith.constant 0 : i32
    %c0_i32_2 = arith.constant 0 : i32
    return %c0_i32, %c0_i32_0, %c0_i32_1 : i32, i32, i32
  }
  func.func @transform_4(%arg0: i32) -> (i32, i32, i32) {
    %c0_i32 = arith.constant 0 : i32
    %c0_i32_0 = arith.constant 0 : i32
    %c0_i32_1 = arith.constant 0 : i32
    %c0_i32_2 = arith.constant 0 : i32
    return %c0_i32, %c0_i32_0, %c0_i32_1 : i32, i32, i32
  }
  func.func @transform_5(%arg0: i32) -> (i32, i32, i32) {
    %c0_i32 = arith.constant 0 : i32
    %c0_i32_0 = arith.constant 0 : i32
    %c0_i32_1 = arith.constant 0 : i32
    %c0_i32_2 = arith.constant 0 : i32
    return %c0_i32, %c0_i32_0, %c0_i32_1 : i32, i32, i32
  }
  func.func @transform_6(%arg0: i32) -> (i32, i32, i32) {
    %c0_i32 = arith.constant 0 : i32
    %c0_i32_0 = arith.constant 0 : i32
    %c0_i32_1 = arith.constant 0 : i32
    %c0_i32_2 = arith.constant 0 : i32
    return %c0_i32, %c0_i32_0, %c0_i32_1 : i32, i32, i32
  }
  func.func @transform_7(%arg0: i32) -> (i32, i32, i32) {
    %c0_i32 = arith.constant 0 : i32
    %c0_i32_0 = arith.constant 0 : i32
    %c0_i32_1 = arith.constant 0 : i32
    %c0_i32_2 = arith.constant 0 : i32
    return %c0_i32, %c0_i32_0, %c0_i32_1 : i32, i32, i32
  }
  func.func @transform_8(%arg0: i32) -> (i32, i32, i32) {
    %c0_i32 = arith.constant 0 : i32
    %c0_i32_0 = arith.constant 0 : i32
    %c0_i32_1 = arith.constant 0 : i32
    %c0_i32_2 = arith.constant 0 : i32
    return %c0_i32, %c0_i32_0, %c0_i32_1 : i32, i32, i32
  }
  func.func @transform_9(%arg0: i32) -> (i32, i32, i32) {
    %c0_i32 = arith.constant 0 : i32
    %c0_i32_0 = arith.constant 0 : i32
    %c0_i32_1 = arith.constant 0 : i32
    %c0_i32_2 = arith.constant 0 : i32
    return %c0_i32, %c0_i32_0, %c0_i32_1 : i32, i32, i32
  }
  func.func @transform_10(%arg0: i32) -> (i32, i32, i32) {
    %c0_i32 = arith.constant 0 : i32
    %c0_i32_0 = arith.constant 0 : i32
    %c0_i32_1 = arith.constant 0 : i32
    %c0_i32_2 = arith.constant 0 : i32
    return %c0_i32, %c0_i32_0, %c0_i32_1 : i32, i32, i32
  }
  func.func @transform_11(%arg0: i32) -> (i32, i32) {
    %c0_i32 = arith.constant 0 : i32
    %c0_i32_0 = arith.constant 0 : i32
    return %arg0, %c0_i32 : i32, i32
  }
}

</mosaic_0001>

<llo_original>
// kernel: volume_preserving_forward.1
$region0: #{volume_preserving_forward.1}
  #allocation0 [shape = 'u32[]', space=smem, size = 0x4, offset = 0x4, fixed_abs, tag = 'smem constant byte address 0x4 - core index']
  #allocation1 [shape = 'u32[144,128]{1,0:T(1,128)}', space=vmem, size = 0x12000, scoped, tag = 'internal scratch']
  %s0 = inlined_call_operand.vmem [shape: f32[128,16], index: 0, kind: input, shape index: {}]
  %s1 = inlined_call_operand.vmem [shape: f32[5,16,16], index: 1, kind: input, shape index: {}]
  %s2 = inlined_call_operand.vmem [shape: f32[5,16,1], index: 2, kind: input, shape index: {}]
  %s3 = inlined_call_operand.vmem [shape: f32[4,8,16], index: 3, kind: input, shape index: {}]
  %s4 = inlined_call_operand.vmem [shape: f32[4,8,1], index: 4, kind: input, shape index: {}]
  %s5 = inlined_call_operand.vmem [shape: f32[4,32,8], index: 5, kind: input, shape index: {}]
  %s6 = inlined_call_operand.vmem [shape: f32[4,32,1], index: 6, kind: input, shape index: {}]
  %s7 = inlined_call_operand.vmem [shape: f32[4,32,32], index: 7, kind: input, shape index: {}]
  %s8 = inlined_call_operand.vmem [shape: f32[4,32,1], index: 8, kind: input, shape index: {}]
  %s9 = inlined_call_operand.vmem [shape: f32[4,8,32], index: 9, kind: input, shape index: {}]
  %s10 = inlined_call_operand.vmem [shape: f32[4,8,1], index: 10, kind: input, shape index: {}]
  %s11 = inlined_call_operand.vmem [shape: f32[128,16], index: 11, kind: output, shape index: {}]
  %s12 = sld [smem:[#allocation0]]
  $region54: #{volume_preserving_forward.1} parent=0
    _
  %s14 = ssub.s32 1, %s12
  %s15 = scalar_select 0, %s14, %s12
  // Predicated region
  $region2: #{volume_preserving_forward.1} parent=0 // pred_check
    _
  $region3: #{volume_preserving_forward.1} parent=0 // pred_check_branch
    %17 = sbr.rel (0) target = $region5
  $region4: #{volume_preserving_forward.1} parent=0 // pred_region
    _
  $region5: #{volume_preserving_forward.1} parent=0 // pred_fallthru
    _
  // Predicated region
  $region6: #{volume_preserving_forward.1} parent=0 // pred_check
    _
  $region7: #{volume_preserving_forward.1} parent=0 // pred_check_branch
    %19 = sbr.rel (0) target = $region9
  $region8: #{volume_preserving_forward.1} parent=0 // pred_region
    _
  $region9: #{volume_preserving_forward.1} parent=0 // pred_fallthru
    _
  // Predicated region
  $region10: #{volume_preserving_forward.1} parent=0 // pred_check
    _
  $region11: #{volume_preserving_forward.1} parent=0 // pred_check_branch
    %21 = sbr.rel (0) target = $region13
  $region12: #{volume_preserving_forward.1} parent=0 // pred_region
    _
  $region13: #{volume_preserving_forward.1} parent=0 // pred_fallthru
    _
  // Predicated region
  $region14: #{volume_preserving_forward.1} parent=0 // pred_check
    _
  $region15: #{volume_preserving_forward.1} parent=0 // pred_check_branch
    %23 = sbr.rel (0) target = $region17
  $region16: #{volume_preserving_forward.1} parent=0 // pred_region
    _
  $region17: #{volume_preserving_forward.1} parent=0 // pred_fallthru
    _
  // Predicated region
  $region18: #{volume_preserving_forward.1} parent=0 // pred_check
    _
  $region19: #{volume_preserving_forward.1} parent=0 // pred_check_branch
    %25 = sbr.rel (0) target = $region21
  $region20: #{volume_preserving_forward.1} parent=0 // pred_region
    _
  $region21: #{volume_preserving_forward.1} parent=0 // pred_fallthru
    _
  // Predicated region
  $region22: #{volume_preserving_forward.1} parent=0 // pred_check
    _
  $region23: #{volume_preserving_forward.1} parent=0 // pred_check_branch
    %27 = sbr.rel (0) target = $region25
  $region24: #{volume_preserving_forward.1} parent=0 // pred_region
    _
  $region25: #{volume_preserving_forward.1} parent=0 // pred_fallthru
    _
  // Predicated region
  $region26: #{volume_preserving_forward.1} parent=0 // pred_check
    _
  $region27: #{volume_preserving_forward.1} parent=0 // pred_check_branch
    %29 = sbr.rel (0) target = $region29
  $region28: #{volume_preserving_forward.1} parent=0 // pred_region
    _
  $region29: #{volume_preserving_forward.1} parent=0 // pred_fallthru
    _
  // Predicated region
  $region30: #{volume_preserving_forward.1} parent=0 // pred_check
    _
  $region31: #{volume_preserving_forward.1} parent=0 // pred_check_branch
    %31 = sbr.rel (0) target = $region33
  $region32: #{volume_preserving_forward.1} parent=0 // pred_region
    _
  $region33: #{volume_preserving_forward.1} parent=0 // pred_fallthru
    _
  // Predicated region
  $region34: #{volume_preserving_forward.1} parent=0 // pred_check
    _
  $region35: #{volume_preserving_forward.1} parent=0 // pred_check_branch
    %33 = sbr.rel (0) target = $region37
  $region36: #{volume_preserving_forward.1} parent=0 // pred_region
    _
  $region37: #{volume_preserving_forward.1} parent=0 // pred_fallthru
    _
  // Predicated region
  $region38: #{volume_preserving_forward.1} parent=0 // pred_check
    _
  $region39: #{volume_preserving_forward.1} parent=0 // pred_check_branch
    %35 = sbr.rel (0) target = $region41
  $region40: #{volume_preserving_forward.1} parent=0 // pred_region
    _
  $region41: #{volume_preserving_forward.1} parent=0 // pred_fallthru
    _
  // Predicated region
  $region42: #{volume_preserving_forward.1} parent=0 // pred_check
    _
  $region43: #{volume_preserving_forward.1} parent=0 // pred_check_branch
    %37 = sbr.rel (0) target = $region45
  $region44: #{volume_preserving_forward.1} parent=0 // pred_region
    _
  $region45: #{volume_preserving_forward.1} parent=0 // pred_fallthru
    _
  %v38 = vld [vmem:[%s0] sm:$0xff]
  %v39 = vld [vmem:[%s0 + $0x8] sm:$0xff]
  %v40 = vld [vmem:[%s0 + $0x10] sm:$0xff]
  %v41 = vld [vmem:[%s0 + $0x18] sm:$0xff]
  %v42 = vld [vmem:[%s0 + $0x20] sm:$0xff]
  %v43 = vld [vmem:[%s0 + $0x28] sm:$0xff]
  %v44 = vld [vmem:[%s0 + $0x30] sm:$0xff]
  %v45 = vld [vmem:[%s0 + $0x38] sm:$0xff]
  %v46 = vld [vmem:[%s0 + $0x40] sm:$0xff]
  %v47 = vld [vmem:[%s0 + $0x48] sm:$0xff]
  %v48 = vld [vmem:[%s0 + $0x50] sm:$0xff]
  %v49 = vld [vmem:[%s0 + $0x58] sm:$0xff]
  %v50 = vld [vmem:[%s0 + $0x60] sm:$0xff]
  %v51 = vld [vmem:[%s0 + $0x68] sm:$0xff]
  %v52 = vld [vmem:[%s0 + $0x70] sm:$0xff]
  %v53 = vld [vmem:[%s0 + $0x78] sm:$0xff]
  %v54 = vld [vmem:[%s1] sm:$0xff]
  %v55 = vld [vmem:[%s1 + $0x8] sm:$0xff]
  %v56 = vld [vmem:[%s2] sm:$0xff]
  %v57 = vld [vmem:[%s2 + $0x8] sm:$0xff]
  %59 = vset.pattern.permute.xlu0 0
  %60 = vperm.xlu0 %59, %v56
  %v61 = vpop.permute.xlu0 %60
  %64 = vset.pattern.permute.xlu0 0
  %65 = vperm.xlu0 %64, %v57
  %v66 = vpop.permute.xlu0 %65
  %vm68 = vcmask 130048
  %v70 = vsel %vm68, %v54, 0
  %v73 = vsel %vm68, %v55, 0
  %v76 = vsel %vm68, %v38, 0
  %v79 = vsel %vm68, %v39, 0
  %v82 = vsel %vm68, %v40, 0
  %v85 = vsel %vm68, %v41, 0
  %v88 = vsel %vm68, %v42, 0
  %v91 = vsel %vm68, %v43, 0
  %v94 = vsel %vm68, %v44, 0
  %v97 = vsel %vm68, %v45, 0
  %v100 = vsel %vm68, %v46, 0
  %v103 = vsel %vm68, %v47, 0
  %v106 = vsel %vm68, %v48, 0
  %v109 = vsel %vm68, %v49, 0
  %v112 = vsel %vm68, %v50, 0
  %v115 = vsel %vm68, %v51, 0
  %v118 = vsel %vm68, %v52, 0
  %v121 = vsel %vm68, %v53, 0
  %123 = vmatprep.subr.mxu0 0.0
  %124 = vmatpush1.xpose.msra.mxu0 %v121
  %125 = vmatprep.subr.mxu0 0.0
  %126 = vmatpush1.xpose.msra.mxu0 %v118
  %127 = vmatprep.subr.mxu0 0.0
  %128 = vmatpush1.xpose.msra.mxu0 %v115
  %129 = vmatprep.subr.mxu0 0.0
  %130 = vmatpush1.xpose.msra.mxu0 %v112
  %131 = vmatprep.subr.mxu0 0.0
  %132 = vmatpush1.xpose.msra.mxu0 %v109
  %133 = vmatprep.subr.mxu0 0.0
  %134 = vmatpush1.xpose.msra.mxu0 %v106
  %135 = vmatprep.subr.mxu0 0.0
  %136 = vmatpush1.xpose.msra.mxu0 %v103
  %137 = vmatprep.subr.mxu0 0.0
  %138 = vmatpush1.xpose.msra.mxu0 %v100
  %139 = vmatprep.subr.mxu0 0.0
  %140 = vmatpush1.xpose.msra.mxu0 %v97
  %141 = vmatprep.subr.mxu0 0.0
  %142 = vmatpush1.xpose.msra.mxu0 %v94
  %143 = vmatprep.subr.mxu0 0.0
  %144 = vmatpush1.xpose.msra.mxu0 %v91
  %145 = vmatprep.subr.mxu0 0.0
  %146 = vmatpush1.xpose.msra.mxu0 %v88
  %147 = vmatprep.subr.mxu0 0.0
  %148 = vmatpush1.xpose.msra.mxu0 %v85
  %149 = vmatprep.subr.mxu0 0.0
  %150 = vmatpush1.xpose.msra.mxu0 %v82
  %151 = vmatprep.subr.mxu0 0.0
  %152 = vmatpush1.xpose.msra.mxu0 %v79
  %153 = vmatprep.subr.mxu0 0.0
  %154 = vmatpush1.xpose.msra.mxu0 %v76
  %155 = vmatprep.subr.mxu0 0.0
  %156 = vmatpush2.xpose.msra.mxu0 0.0
  %157 = vmatprep.subr.mxu0 0.0
  %158 = vmatpush2.xpose.msra.mxu0 0.0
  %159 = vmatprep.subr.mxu0 0.0
  %160 = vmatpush2.xpose.msra.mxu0 0.0
  %161 = vmatprep.subr.mxu0 0.0
  %162 = vmatpush2.xpose.msra.mxu0 0.0
  %163 = vmatprep.subr.mxu0 0.0
  %164 = vmatpush2.xpose.msra.mxu0 0.0
  %165 = vmatprep.subr.mxu0 0.0
  %166 = vmatpush2.xpose.msra.mxu0 0.0
  %167 = vmatprep.subr.mxu0 0.0
  %168 = vmatpush2.xpose.msra.mxu0 0.0
  %169 = vmatprep.subr.mxu0 0.0
  %170 = vmatpush2.xpose.msra.mxu0 0.0
  %171 = vmatprep.subr.mxu0 0.0
  %172 = vmatpush2.xpose.msra.mxu0 0.0
  %173 = vmatprep.subr.mxu0 0.0
  %174 = vmatpush2.xpose.msra.mxu0 0.0
  %175 = vmatprep.subr.mxu0 0.0
  %176 = vmatpush2.xpose.msra.mxu0 0.0
  %177 = vmatprep.subr.mxu0 0.0
  %178 = vmatpush2.xpose.msra.mxu0 0.0
  %179 = vmatprep.subr.mxu0 0.0
  %180 = vmatpush2.xpose.msra.mxu0 0.0
  %181 = vmatprep.subr.mxu0 0.0
  %182 = vmatpush2.xpose.msra.mxu0 0.0
  %183 = vmatprep.subr.mxu0 0.0
  %184 = vmatpush2.xpose.msra.mxu0 0.0
  %185 = vmatprep.subr.mxu0 0.0
  %186 = vmatpush2.xpose.msra.mxu0 0.0
  %187 = vmatprep.mubr.f32.mxu0 0.0
  %188 = vmatmul.mubr.f32.gmra.mxu0 %v70
  %v189 = vpop.f32.mrf.mxu0
  %v190 = vadd.f32 %v61, %v189
  %v191 = vpop.f32.mrf.mxu0
  %192 = vmatprep.mubr.f32.mxu0 0.0
  %193 = vmatmul.mubr.f32.gmra.mxu0 %v73
  %v194 = vpop.f32.mrf.mxu0
  %v195 = vadd.f32 %v66, %v194
  %v196 = vpop.f32.mrf.mxu0
  %197 = vdwg.mxu0
  %v198 = vld [vmem:[%s3] sm:$0xff]
  %v199 = vld [vmem:[%s4] sm:$0xff]
  %201 = vset.pattern.permute.xlu0 0
  %202 = vperm.xlu0 %201, %v199
  %v203 = vpop.permute.xlu0 %202
  %v206 = vsel %vm68, %v198, 0
  %208 = vmatprep.subr.mxu0 0.0
  %209 = vmatpush1.xpose.msra.mxu0 %v121
  %210 = vmatprep.subr.mxu0 0.0
  %211 = vmatpush1.xpose.msra.mxu0 %v118
  %212 = vmatprep.subr.mxu0 0.0
  %213 = vmatpush1.xpose.msra.mxu0 %v115
  %214 = vmatprep.subr.mxu0 0.0
  %215 = vmatpush1.xpose.msra.mxu0 %v112
  %216 = vmatprep.subr.mxu0 0.0
  %217 = vmatpush1.xpose.msra.mxu0 %v109
  %218 = vmatprep.subr.mxu0 0.0
  %219 = vmatpush1.xpose.msra.mxu0 %v106
  %220 = vmatprep.subr.mxu0 0.0
  %221 = vmatpush1.xpose.msra.mxu0 %v103
  %222 = vmatprep.subr.mxu0 0.0
  %223 = vmatpush1.xpose.msra.mxu0 %v100
  %224 = vmatprep.subr.mxu0 0.0
  %225 = vmatpush1.xpose.msra.mxu0 %v97
  %226 = vmatprep.subr.mxu0 0.0
  %227 = vmatpush1.xpose.msra.mxu0 %v94
  %228 = vmatprep.subr.mxu0 0.0
  %229 = vmatpush1.xpose.msra.mxu0 %v91
  %230 = vmatprep.subr.mxu0 0.0
  %231 = vmatpush1.xpose.msra.mxu0 %v88
  %232 = vmatprep.subr.mxu0 0.0
  %233 = vmatpush1.xpose.msra.mxu0 %v85
  %234 = vmatprep.subr.mxu0 0.0
  %235 = vmatpush1.xpose.msra.mxu0 %v82
  %236 = vmatprep.subr.mxu0 0.0
  %237 = vmatpush1.xpose.msra.mxu0 %v79
  %238 = vmatprep.subr.mxu0 0.0
  %239 = vmatpush1.xpose.msra.mxu0 %v76
  %240 = vmatprep.subr.mxu0 0.0
  %241 = vmatpush2.xpose.msra.mxu0 0.0
  %242 = vmatprep.subr.mxu0 0.0
  %243 = vmatpush2.xpose.msra.mxu0 0.0
  %244 = vmatprep.subr.mxu0 0.0
  %245 = vmatpush2.xpose.msra.mxu0 0.0
  %246 = vmatprep.subr.mxu0 0.0
  %247 = vmatpush2.xpose.msra.mxu0 0.0
  %248 = vmatprep.subr.mxu0 0.0
  %249 = vmatpush2.xpose.msra.mxu0 0.0
  %250 = vmatprep.subr.mxu0 0.0
  %251 = vmatpush2.xpose.msra.mxu0 0.0
  %252 = vmatprep.subr.mxu0 0.0
  %253 = vmatpush2.xpose.msra.mxu0 0.0
  %254 = vmatprep.subr.mxu0 0.0
  %255 = vmatpush2.xpose.msra.mxu0 0.0
  %256 = vmatprep.subr.mxu0 0.0
  %257 = vmatpush2.xpose.msra.mxu0 0.0
  %258 = vmatprep.subr.mxu0 0.0
  %259 = vmatpush2.xpose.msra.mxu0 0.0
  %260 = vmatprep.subr.mxu0 0.0
  %261 = vmatpush2.xpose.msra.mxu0 0.0
  %262 = vmatprep.subr.mxu0 0.0
  %263 = vmatpush2.xpose.msra.mxu0 0.0
  %264 = vmatprep.subr.mxu0 0.0
  %265 = vmatpush2.xpose.msra.mxu0 0.0
  %266 = vmatprep.subr.mxu0 0.0
  %267 = vmatpush2.xpose.msra.mxu0 0.0
  %268 = vmatprep.subr.mxu0 0.0
  %269 = vmatpush2.xpose.msra.mxu0 0.0
  %270 = vmatprep.subr.mxu0 0.0
  %271 = vmatpush2.xpose.msra.mxu0 0.0
  %272 = vmatprep.mubr.f32.mxu0 0.0
  %273 = vmatmul.mubr.f32.gmra.mxu0 %v206
  %v274 = vpop.f32.mrf.mxu0
  %v275 = vadd.f32 %v203, %v274
  %v276 = vpop.f32.mrf.mxu0
  %277 = vdwg.mxu0
  %v278 = vmax.f32 %v275, 0.0
  %v279 = vld [vmem:[%s5] sm:$0xff]
  %v280 = vld [vmem:[%s5 + $0x8] sm:$0xff]
  %v281 = vld [vmem:[%s5 + $0x10] sm:$0xff]
  %v282 = vld [vmem:[%s5 + $0x18] sm:$0xff]
  %v283 = vld [vmem:[%s6] sm:$0xff]
  %v284 = vld [vmem:[%s6 + $0x8] sm:$0xff]
  %v285 = vld [vmem:[%s6 + $0x10] sm:$0xff]
  %v286 = vld [vmem:[%s6 + $0x18] sm:$0xff]
  %288 = vset.pattern.permute.xlu0 0
  %289 = vperm.xlu0 %288, %v283
  %v290 = vpop.permute.xlu0 %289
  %293 = vset.pattern.permute.xlu0 0
  %294 = vperm.xlu0 %293, %v284
  %v295 = vpop.permute.xlu0 %294
  %298 = vset.pattern.permute.xlu0 0
  %299 = vperm.xlu0 %298, %v285
  %v300 = vpop.permute.xlu0 %299
  %303 = vset.pattern.permute.xlu0 0
  %304 = vperm.xlu0 %303, %v286
  %v305 = vpop.permute.xlu0 %304
  %vm307 = vcmask 64512
  %v309 = vsel %vm307, %v279, 0
  %v312 = vsel %vm307, %v280, 0
  %v315 = vsel %vm307, %v281, 0
  %v318 = vsel %vm307, %v282, 0
  %320 = vmatprep.subr.mxu0 0.0
  %321 = vmatpush1.msra.mxu0 0.0
  %322 = vmatprep.subr.mxu0 0.0
  %323 = vmatpush1.msra.mxu0 0.0
  %324 = vmatprep.subr.mxu0 0.0
  %325 = vmatpush1.msra.mxu0 0.0
  %326 = vmatprep.subr.mxu0 0.0
  %327 = vmatpush1.msra.mxu0 0.0
  %328 = vmatprep.subr.mxu0 0.0
  %329 = vmatpush1.msra.mxu0 0.0
  %330 = vmatprep.subr.mxu0 0.0
  %331 = vmatpush1.msra.mxu0 0.0
  %332 = vmatprep.subr.mxu0 0.0
  %333 = vmatpush1.msra.mxu0 0.0
  %334 = vmatprep.subr.mxu0 0.0
  %335 = vmatpush1.msra.mxu0 0.0
  %336 = vmatprep.subr.mxu0 0.0
  %337 = vmatpush1.msra.mxu0 0.0
  %338 = vmatprep.subr.mxu0 0.0
  %339 = vmatpush1.msra.mxu0 0.0
  %340 = vmatprep.subr.mxu0 0.0
  %341 = vmatpush1.msra.mxu0 0.0
  %342 = vmatprep.subr.mxu0 0.0
  %343 = vmatpush1.msra.mxu0 0.0
  %344 = vmatprep.subr.mxu0 0.0
  %345 = vmatpush1.msra.mxu0 0.0
  %346 = vmatprep.subr.mxu0 0.0
  %347 = vmatpush1.msra.mxu0 0.0
  %348 = vmatprep.subr.mxu0 0.0
  %349 = vmatpush1.msra.mxu0 0.0
  %350 = vmatprep.subr.mxu0 0.0
  %351 = vmatpush1.msra.mxu0 %v278
  %352 = vmatprep.subr.mxu0 0.0
  %353 = vmatpush2.msra.mxu0 0.0
  %354 = vmatprep.subr.mxu0 0.0
  %355 = vmatpush2.msra.mxu0 0.0
  %356 = vmatprep.subr.mxu0 0.0
  %357 = vmatpush2.msra.mxu0 0.0
  %358 = vmatprep.subr.mxu0 0.0
  %359 = vmatpush2.msra.mxu0 0.0
  %360 = vmatprep.subr.mxu0 0.0
  %361 = vmatpush2.msra.mxu0 0.0
  %362 = vmatprep.subr.mxu0 0.0
  %363 = vmatpush2.msra.mxu0 0.0
  %364 = vmatprep.subr.mxu0 0.0
  %365 = vmatpush2.msra.mxu0 0.0
  %366 = vmatprep.subr.mxu0 0.0
  %367 = vmatpush2.msra.mxu0 0.0
  %368 = vmatprep.subr.mxu0 0.0
  %369 = vmatpush2.msra.mxu0 0.0
  %370 = vmatprep.subr.mxu0 0.0
  %371 = vmatpush2.msra.mxu0 0.0
  %372 = vmatprep.subr.mxu0 0.0
  %373 = vmatpush2.msra.mxu0 0.0
  %374 = vmatprep.subr.mxu0 0.0
  %375 = vmatpush2.msra.mxu0 0.0
  %376 = vmatprep.subr.mxu0 0.0
  %377 = vmatpush2.msra.mxu0 0.0
  %378 = vmatprep.subr.mxu0 0.0
  %379 = vmatpush2.msra.mxu0 0.0
  %380 = vmatprep.subr.mxu0 0.0
  %381 = vmatpush2.msra.mxu0 0.0
  %382 = vmatprep.subr.mxu0 0.0
  %383 = vmatpush2.msra.mxu0 0.0
  %384 = vmatprep.mubr.f32.mxu0 0.0
  %385 = vmatmul.mubr.f32.gmra.mxu0 %v309
  %v386 = vpop.f32.mrf.mxu0
  %v387 = vadd.f32 %v290, %v386
  %v388 = vpop.f32.mrf.mxu0
  %389 = vmatprep.mubr.f32.mxu0 0.0
  %390 = vmatmul.mubr.f32.gmra.mxu0 %v312
  %v391 = vpop.f32.mrf.mxu0
  %v392 = vadd.f32 %v295, %v391
  %v393 = vpop.f32.mrf.mxu0
  %394 = vmatprep.mubr.f32.mxu0 0.0
  %395 = vmatmul.mubr.f32.gmra.mxu0 %v315
  %v396 = vpop.f32.mrf.mxu0
  %v397 = vadd.f32 %v300, %v396
  %v398 = vpop.f32.mrf.mxu0
  %399 = vmatprep.mubr.f32.mxu0 0.0
  %400 = vmatmul.mubr.f32.gmra.mxu0 %v318
  %v401 = vpop.f32.mrf.mxu0
  %v402 = vadd.f32 %v305, %v401
  %v403 = vpop.f32.mrf.mxu0
  %404 = vdwg.mxu0
  %v405 = vmax.f32 %v387, 0.0
  %v406 = vmax.f32 %v392, 0.0
  %v407 = vmax.f32 %v397, 0.0
  %v408 = vmax.f32 %v402, 0.0
  %v409 = vld [vmem:[%s7] sm:$0xff]
  %v410 = vld [vmem:[%s7 + $0x8] sm:$0xff]
  %v411 = vld [vmem:[%s7 + $0x10] sm:$0xff]
  %v412 = vld [vmem:[%s7 + $0x18] sm:$0xff]
  %v413 = vld [vmem:[%s8] sm:$0xff]
  %v414 = vld [vmem:[%s8 + $0x8] sm:$0xff]
  %v415 = vld [vmem:[%s8 + $0x10] sm:$0xff]
  %v416 = vld [vmem:[%s8 + $0x18] sm:$0xff]
  %418 = vset.pattern.permute.xlu0 0
  %419 = vperm.xlu0 %418, %v413
  %v420 = vpop.permute.xlu0 %419
  %423 = vset.pattern.permute.xlu0 0
  %424 = vperm.xlu0 %423, %v414
  %v425 = vpop.permute.xlu0 %424
  %428 = vset.pattern.permute.xlu0 0
  %429 = vperm.xlu0 %428, %v415
  %v430 = vpop.permute.xlu0 %429
  %433 = vset.pattern.permute.xlu0 0
  %434 = vperm.xlu0 %433, %v416
  %v435 = vpop.permute.xlu0 %434
  %vm437 = vcmask 261120
  %v439 = vsel %vm437, %v409, 0
  %v442 = vsel %vm437, %v410, 0
  %v445 = vsel %vm437, %v411, 0
  %v448 = vsel %vm437, %v412, 0
  %450 = vmatprep.subr.mxu0 0.0
  %451 = vmatpush1.msra.mxu0 0.0
  %452 = vmatprep.subr.mxu0 0.0
  %453 = vmatpush1.msra.mxu0 0.0
  %454 = vmatprep.subr.mxu0 0.0
  %455 = vmatpush1.msra.mxu0 0.0
  %456 = vmatprep.subr.mxu0 0.0
  %457 = vmatpush1.msra.mxu0 0.0
  %458 = vmatprep.subr.mxu0 0.0
  %459 = vmatpush1.msra.mxu0 0.0
  %460 = vmatprep.subr.mxu0 0.0
  %461 = vmatpush1.msra.mxu0 0.0
  %462 = vmatprep.subr.mxu0 0.0
  %463 = vmatpush1.msra.mxu0 0.0
  %464 = vmatprep.subr.mxu0 0.0
  %465 = vmatpush1.msra.mxu0 0.0
  %466 = vmatprep.subr.mxu0 0.0
  %467 = vmatpush1.msra.mxu0 0.0
  %468 = vmatprep.subr.mxu0 0.0
  %469 = vmatpush1.msra.mxu0 0.0
  %470 = vmatprep.subr.mxu0 0.0
  %471 = vmatpush1.msra.mxu0 0.0
  %472 = vmatprep.subr.mxu0 0.0
  %473 = vmatpush1.msra.mxu0 0.0
  %474 = vmatprep.subr.mxu0 0.0
  %475 = vmatpush1.msra.mxu0 %v408
  %476 = vmatprep.subr.mxu0 0.0
  %477 = vmatpush1.msra.mxu0 %v407
  %478 = vmatprep.subr.mxu0 0.0
  %479 = vmatpush1.msra.mxu0 %v406
  %480 = vmatprep.subr.mxu0 0.0
  %481 = vmatpush1.msra.mxu0 %v405
  %482 = vmatprep.subr.mxu0 0.0
  %483 = vmatpush2.msra.mxu0 0.0
  %484 = vmatprep.subr.mxu0 0.0
  %485 = vmatpush2.msra.mxu0 0.0
  %486 = vmatprep.subr.mxu0 0.0
  %487 = vmatpush2.msra.mxu0 0.0
  %488 = vmatprep.subr.mxu0 0.0
  %489 = vmatpush2.msra.mxu0 0.0
  %490 = vmatprep.subr.mxu0 0.0
  %491 = vmatpush2.msra.mxu0 0.0
  %492 = vmatprep.subr.mxu0 0.0
  %493 = vmatpush2.msra.mxu0 0.0
  %494 = vmatprep.subr.mxu0 0.0
  %495 = vmatpush2.msra.mxu0 0.0
  %496 = vmatprep.subr.mxu0 0.0
  %497 = vmatpush2.msra.mxu0 0.0
  %498 = vmatprep.subr.mxu0 0.0
  %499 = vmatpush2.msra.mxu0 0.0
  %500 = vmatprep.subr.mxu0 0.0
  %501 = vmatpush2.msra.mxu0 0.0
  %502 = vmatprep.subr.mxu0 0.0
  %503 = vmatpush2.msra.mxu0 0.0
  %504 = vmatprep.subr.mxu0 0.0
  %505 = vmatpush2.msra.mxu0 0.0
  %506 = vmatprep.subr.mxu0 0.0
  %507 = vmatpush2.msra.mxu0 0.0
  %508 = vmatprep.subr.mxu0 0.0
  %509 = vmatpush2.msra.mxu0 0.0
  %510 = vmatprep.subr.mxu0 0.0
  %511 = vmatpush2.msra.mxu0 0.0
  %512 = vmatprep.subr.mxu0 0.0
  %513 = vmatpush2.msra.mxu0 0.0
  %514 = vmatprep.mubr.f32.mxu0 0.0
  %515 = vmatmul.mubr.f32.gmra.mxu0 %v439
  %v516 = vpop.f32.mrf.mxu0
  %v517 = vadd.f32 %v420, %v516
  %v518 = vpop.f32.mrf.mxu0
  %519 = vmatprep.mubr.f32.mxu0 0.0
  %520 = vmatmul.mubr.f32.gmra.mxu0 %v442
  %v521 = vpop.f32.mrf.mxu0
  %v522 = vadd.f32 %v425, %v521
  %v523 = vpop.f32.mrf.mxu0
  %524 = vmatprep.mubr.f32.mxu0 0.0
  %525 = vmatmul.mubr.f32.gmra.mxu0 %v445
  %v526 = vpop.f32.mrf.mxu0
  %v527 = vadd.f32 %v430, %v526
  %v528 = vpop.f32.mrf.mxu0
  %529 = vmatprep.mubr.f32.mxu0 0.0
  %530 = vmatmul.mubr.f32.gmra.mxu0 %v448
  %v531 = vpop.f32.mrf.mxu0
  %v532 = vadd.f32 %v435, %v531
  %v533 = vpop.f32.mrf.mxu0
  %534 = vdwg.mxu0
  %v535 = vmax.f32 %v517, 0.0
  %v536 = vmax.f32 %v522, 0.0
  %v537 = vmax.f32 %v527, 0.0
  %v538 = vmax.f32 %v532, 0.0
  %v539 = vld [vmem:[%s9] sm:$0xff]
  %v540 = vld [vmem:[%s10] sm:$0xff]
  %542 = vset.pattern.permute.xlu0 0
  %543 = vperm.xlu0 %542, %v540
  %v544 = vpop.permute.xlu0 %543
  %v547 = vsel %vm437, %v539, 0
  %549 = vmatprep.subr.mxu0 0.0
  %550 = vmatpush1.msra.mxu0 0.0
  %551 = vmatprep.subr.mxu0 0.0
  %552 = vmatpush1.msra.mxu0 0.0
  %553 = vmatprep.subr.mxu0 0.0
  %554 = vmatpush1.msra.mxu0 0.0
  %555 = vmatprep.subr.mxu0 0.0
  %556 = vmatpush1.msra.mxu0 0.0
  %557 = vmatprep.subr.mxu0 0.0
  %558 = vmatpush1.msra.mxu0 0.0
  %559 = vmatprep.subr.mxu0 0.0
  %560 = vmatpush1.msra.mxu0 0.0
  %561 = vmatprep.subr.mxu0 0.0
  %562 = vmatpush1.msra.mxu0 0.0
  %563 = vmatprep.subr.mxu0 0.0
  %564 = vmatpush1.msra.mxu0 0.0
  %565 = vmatprep.subr.mxu0 0.0
  %566 = vmatpush1.msra.mxu0 0.0
  %567 = vmatprep.subr.mxu0 0.0
  %568 = vmatpush1.msra.mxu0 0.0
  %569 = vmatprep.subr.mxu0 0.0
  %570 = vmatpush1.msra.mxu0 0.0
  %571 = vmatprep.subr.mxu0 0.0
  %572 = vmatpush1.msra.mxu0 0.0
  %573 = vmatprep.subr.mxu0 0.0
  %574 = vmatpush1.msra.mxu0 %v538
  %575 = vmatprep.subr.mxu0 0.0
  %576 = vmatpush1.msra.mxu0 %v537
  %577 = vmatprep.subr.mxu0 0.0
  %578 = vmatpush1.msra.mxu0 %v536
  %579 = vmatprep.subr.mxu0 0.0
  %580 = vmatpush1.msra.mxu0 %v535
  %581 = vmatprep.subr.mxu0 0.0
  %582 = vmatpush2.msra.mxu0 0.0
  %583 = vmatprep.subr.mxu0 0.0
  %584 = vmatpush2.msra.mxu0 0.0
  %585 = vmatprep.subr.mxu0 0.0
  %586 = vmatpush2.msra.mxu0 0.0
  %587 = vmatprep.subr.mxu0 0.0
  %588 = vmatpush2.msra.mxu0 0.0
  %589 = vmatprep.subr.mxu0 0.0
  %590 = vmatpush2.msra.mxu0 0.0
  %591 = vmatprep.subr.mxu0 0.0
  %592 = vmatpush2.msra.mxu0 0.0
  %593 = vmatprep.subr.mxu0 0.0
  %594 = vmatpush2.msra.mxu0 0.0
  %595 = vmatprep.subr.mxu0 0.0
  %596 = vmatpush2.msra.mxu0 0.0
  %597 = vmatprep.subr.mxu0 0.0
  %598 = vmatpush2.msra.mxu0 0.0
  %599 = vmatprep.subr.mxu0 0.0
  %600 = vmatpush2.msra.mxu0 0.0
  %601 = vmatprep.subr.mxu0 0.0
  %602 = vmatpush2.msra.mxu0 0.0
  %603 = vmatprep.subr.mxu0 0.0
  %604 = vmatpush2.msra.mxu0 0.0
  %605 = vmatprep.subr.mxu0 0.0
  %606 = vmatpush2.msra.mxu0 0.0
  %607 = vmatprep.subr.mxu0 0.0
  %608 = vmatpush2.msra.mxu0 0.0
  %609 = vmatprep.subr.mxu0 0.0
  %610 = vmatpush2.msra.mxu0 0.0
  %611 = vmatprep.subr.mxu0 0.0
  %612 = vmatpush2.msra.mxu0 0.0
  %613 = vmatprep.mubr.f32.mxu0 0.0
  %614 = vmatmul.mubr.f32.gmra.mxu0 %v547
  %v615 = vpop.f32.mrf.mxu0
  %v616 = vadd.f32 %v544, %v615
  %v617 = vpop.f32.mrf.mxu0
  %618 = vdwg.mxu0
  %v619 = vadd.f32 %v190, %v616
  %s620 = scalar_lea.vmem %s1, 16
  %v621 = vld [vmem:[%s620] sm:$0xff]
  %v622 = vld [vmem:[%s620 + $0x8] sm:$0xff]
  %s623 = scalar_lea.vmem %s2, 16
  %v624 = vld [vmem:[%s623] sm:$0xff]
  %v625 = vld [vmem:[%s623 + $0x8] sm:$0xff]
  %627 = vset.pattern.permute.xlu0 0
  %628 = vperm.xlu0 %627, %v624
  %v629 = vpop.permute.xlu0 %628
  %632 = vset.pattern.permute.xlu0 0
  %633 = vperm.xlu0 %632, %v625
  %v634 = vpop.permute.xlu0 %633
  %v637 = vsel %vm68, %v621, 0
  %v640 = vsel %vm68, %v622, 0
  %642 = vmatprep.subr.mxu0 0.0
  %643 = vmatpush1.msra.mxu0 0.0
  %644 = vmatprep.subr.mxu0 0.0
  %645 = vmatpush1.msra.mxu0 0.0
  %646 = vmatprep.subr.mxu0 0.0
  %647 = vmatpush1.msra.mxu0 0.0
  %648 = vmatprep.subr.mxu0 0.0
  %649 = vmatpush1.msra.mxu0 0.0
  %650 = vmatprep.subr.mxu0 0.0
  %651 = vmatpush1.msra.mxu0 0.0
  %652 = vmatprep.subr.mxu0 0.0
  %653 = vmatpush1.msra.mxu0 0.0
  %654 = vmatprep.subr.mxu0 0.0
  %655 = vmatpush1.msra.mxu0 0.0
  %656 = vmatprep.subr.mxu0 0.0
  %657 = vmatpush1.msra.mxu0 0.0
  %658 = vmatprep.subr.mxu0 0.0
  %659 = vmatpush1.msra.mxu0 0.0
  %660 = vmatprep.subr.mxu0 0.0
  %661 = vmatpush1.msra.mxu0 0.0
  %662 = vmatprep.subr.mxu0 0.0
  %663 = vmatpush1.msra.mxu0 0.0
  %664 = vmatprep.subr.mxu0 0.0
  %665 = vmatpush1.msra.mxu0 0.0
  %666 = vmatprep.subr.mxu0 0.0
  %667 = vmatpush1.msra.mxu0 0.0
  %668 = vmatprep.subr.mxu0 0.0
  %669 = vmatpush1.msra.mxu0 0.0
  %670 = vmatprep.subr.mxu0 0.0
  %671 = vmatpush1.msra.mxu0 %v195
  %672 = vmatprep.subr.mxu0 0.0
  %673 = vmatpush1.msra.mxu0 %v619
  %674 = vmatprep.subr.mxu0 0.0
  %675 = vmatpush2.msra.mxu0 0.0
  %676 = vmatprep.subr.mxu0 0.0
  %677 = vmatpush2.msra.mxu0 0.0
  %678 = vmatprep.subr.mxu0 0.0
  %679 = vmatpush2.msra.mxu0 0.0
  %680 = vmatprep.subr.mxu0 0.0
  %681 = vmatpush2.msra.mxu0 0.0
  %682 = vmatprep.subr.mxu0 0.0
  %683 = vmatpush2.msra.mxu0 0.0
  %684 = vmatprep.subr.mxu0 0.0
  %685 = vmatpush2.msra.mxu0 0.0
  %686 = vmatprep.subr.mxu0 0.0
  %687 = vmatpush2.msra.mxu0 0.0
  %688 = vmatprep.subr.mxu0 0.0
  %689 = vmatpush2.msra.mxu0 0.0
  %690 = vmatprep.subr.mxu0 0.0
  %691 = vmatpush2.msra.mxu0 0.0
  %692 = vmatprep.subr.mxu0 0.0
  %693 = vmatpush2.msra.mxu0 0.0
  %694 = vmatprep.subr.mxu0 0.0
  %695 = vmatpush2.msra.mxu0 0.0
  %696 = vmatprep.subr.mxu0 0.0
  %697 = vmatpush2.msra.mxu0 0.0
  %698 = vmatprep.subr.mxu0 0.0
  %699 = vmatpush2.msra.mxu0 0.0
  %700 = vmatprep.subr.mxu0 0.0
  %701 = vmatpush2.msra.mxu0 0.0
  %702 = vmatprep.subr.mxu0 0.0
  %703 = vmatpush2.msra.mxu0 0.0
  %704 = vmatprep.subr.mxu0 0.0
  %705 = vmatpush2.msra.mxu0 0.0
  %706 = vmatprep.mubr.f32.mxu0 0.0
  %707 = vmatmul.mubr.f32.gmra.mxu0 %v637
  %v708 = vpop.f32.mrf.mxu0
  %v709 = vadd.f32 %v629, %v708
  %v710 = vpop.f32.mrf.mxu0
  %711 = vmatprep.mubr.f32.mxu0 0.0
  %712 = vmatmul.mubr.f32.gmra.mxu0 %v640
  %v713 = vpop.f32.mrf.mxu0
  %v714 = vadd.f32 %v634, %v713
  %v715 = vpop.f32.mrf.mxu0
  %716 = vdwg.mxu0
  %s717 = scalar_lea.vmem %s3, 8
  %v718 = vld [vmem:[%s717] sm:$0xff]
  %s719 = scalar_lea.vmem %s4, 8
  %v720 = vld [vmem:[%s719] sm:$0xff]
  %722 = vset.pattern.permute.xlu0 0
  %723 = vperm.xlu0 %722, %v720
  %v724 = vpop.permute.xlu0 %723
  %v727 = vsel %vm68, %v718, 0
  %729 = vmatprep.subr.mxu0 0.0
  %730 = vmatpush1.msra.mxu0 0.0
  %731 = vmatprep.subr.mxu0 0.0
  %732 = vmatpush1.msra.mxu0 0.0
  %733 = vmatprep.subr.mxu0 0.0
  %734 = vmatpush1.msra.mxu0 0.0
  %735 = vmatprep.subr.mxu0 0.0
  %736 = vmatpush1.msra.mxu0 0.0
  %737 = vmatprep.subr.mxu0 0.0
  %738 = vmatpush1.msra.mxu0 0.0
  %739 = vmatprep.subr.mxu0 0.0
  %740 = vmatpush1.msra.mxu0 0.0
  %741 = vmatprep.subr.mxu0 0.0
  %742 = vmatpush1.msra.mxu0 0.0
  %743 = vmatprep.subr.mxu0 0.0
  %744 = vmatpush1.msra.mxu0 0.0
  %745 = vmatprep.subr.mxu0 0.0
  %746 = vmatpush1.msra.mxu0 0.0
  %747 = vmatprep.subr.mxu0 0.0
  %748 = vmatpush1.msra.mxu0 0.0
  %749 = vmatprep.subr.mxu0 0.0
  %750 = vmatpush1.msra.mxu0 0.0
  %751 = vmatprep.subr.mxu0 0.0
  %752 = vmatpush1.msra.mxu0 0.0
  %753 = vmatprep.subr.mxu0 0.0
  %754 = vmatpush1.msra.mxu0 0.0
  %755 = vmatprep.subr.mxu0 0.0
  %756 = vmatpush1.msra.mxu0 0.0
  %757 = vmatprep.subr.mxu0 0.0
  %758 = vmatpush1.msra.mxu0 %v195
  %759 = vmatprep.subr.mxu0 0.0
  %760 = vmatpush1.msra.mxu0 %v619
  %761 = vmatprep.subr.mxu0 0.0
  %762 = vmatpush2.msra.mxu0 0.0
  %763 = vmatprep.subr.mxu0 0.0
  %764 = vmatpush2.msra.mxu0 0.0
  %765 = vmatprep.subr.mxu0 0.0
  %766 = vmatpush2.msra.mxu0 0.0
  %767 = vmatprep.subr.mxu0 0.0
  %768 = vmatpush2.msra.mxu0 0.0
  %769 = vmatprep.subr.mxu0 0.0
  %770 = vmatpush2.msra.mxu0 0.0
  %771 = vmatprep.subr.mxu0 0.0
  %772 = vmatpush2.msra.mxu0 0.0
  %773 = vmatprep.subr.mxu0 0.0
  %774 = vmatpush2.msra.mxu0 0.0
  %775 = vmatprep.subr.mxu0 0.0
  %776 = vmatpush2.msra.mxu0 0.0
  %777 = vmatprep.subr.mxu0 0.0
  %778 = vmatpush2.msra.mxu0 0.0
  %779 = vmatprep.subr.mxu0 0.0
  %780 = vmatpush2.msra.mxu0 0.0
  %781 = vmatprep.subr.mxu0 0.0
  %782 = vmatpush2.msra.mxu0 0.0
  %783 = vmatprep.subr.mxu0 0.0
  %784 = vmatpush2.msra.mxu0 0.0
  %785 = vmatprep.subr.mxu0 0.0
  %786 = vmatpush2.msra.mxu0 0.0
  %787 = vmatprep.subr.mxu0 0.0
  %788 = vmatpush2.msra.mxu0 0.0
  %789 = vmatprep.subr.mxu0 0.0
  %790 = vmatpush2.msra.mxu0 0.0
  %791 = vmatprep.subr.mxu0 0.0
  %792 = vmatpush2.msra.mxu0 0.0
  %793 = vmatprep.mubr.f32.mxu0 0.0
  %794 = vmatmul.mubr.f32.gmra.mxu0 %v727
  %v795 = vpop.f32.mrf.mxu0
  %v796 = vadd.f32 %v724, %v795
  %v797 = vpop.f32.mrf.mxu0
  %798 = vdwg.mxu0
  %v799 = vmax.f32 %v796, 0.0
  %s800 = scalar_lea.vmem %s5, 32
  %v801 = vld [vmem:[%s800] sm:$0xff]
  %v802 = vld [vmem:[%s800 + $0x8] sm:$0xff]
  %v803 = vld [vmem:[%s800 + $0x10] sm:$0xff]
  %v804 = vld [vmem:[%s800 + $0x18] sm:$0xff]
  %s805 = scalar_lea.vmem %s6, 32
  %v806 = vld [vmem:[%s805] sm:$0xff]
  %v807 = vld [vmem:[%s805 + $0x8] sm:$0xff]
  %v808 = vld [vmem:[%s805 + $0x10] sm:$0xff]
  %v809 = vld [vmem:[%s805 + $0x18] sm:$0xff]
  %811 = vset.pattern.permute.xlu0 0
  %812 = vperm.xlu0 %811, %v806
  %v813 = vpop.permute.xlu0 %812
  %816 = vset.pattern.permute.xlu0 0
  %817 = vperm.xlu0 %816, %v807
  %v818 = vpop.permute.xlu0 %817
  %821 = vset.pattern.permute.xlu0 0
  %822 = vperm.xlu0 %821, %v808
  %v823 = vpop.permute.xlu0 %822
  %826 = vset.pattern.permute.xlu0 0
  %827 = vperm.xlu0 %826, %v809
  %v828 = vpop.permute.xlu0 %827
  %v831 = vsel %vm307, %v801, 0
  %v834 = vsel %vm307, %v802, 0
  %v837 = vsel %vm307, %v803, 0
  %v840 = vsel %vm307, %v804, 0
  %842 = vmatprep.subr.mxu0 0.0
  %843 = vmatpush1.msra.mxu0 0.0
  %844 = vmatprep.subr.mxu0 0.0
  %845 = vmatpush1.msra.mxu0 0.0
  %846 = vmatprep.subr.mxu0 0.0
  %847 = vmatpush1.msra.mxu0 0.0
  %848 = vmatprep.subr.mxu0 0.0
  %849 = vmatpush1.msra.mxu0 0.0
  %850 = vmatprep.subr.mxu0 0.0
  %851 = vmatpush1.msra.mxu0 0.0
  %852 = vmatprep.subr.mxu0 0.0
  %853 = vmatpush1.msra.mxu0 0.0
  %854 = vmatprep.subr.mxu0 0.0
  %855 = vmatpush1.msra.mxu0 0.0
  %856 = vmatprep.subr.mxu0 0.0
  %857 = vmatpush1.msra.mxu0 0.0
  %858 = vmatprep.subr.mxu0 0.0
  %859 = vmatpush1.msra.mxu0 0.0
  %860 = vmatprep.subr.mxu0 0.0
  %861 = vmatpush1.msra.mxu0 0.0
  %862 = vmatprep.subr.mxu0 0.0
  %863 = vmatpush1.msra.mxu0 0.0
  %864 = vmatprep.subr.mxu0 0.0
  %865 = vmatpush1.msra.mxu0 0.0
  %866 = vmatprep.subr.mxu0 0.0
  %867 = vmatpush1.msra.mxu0 0.0
  %868 = vmatprep.subr.mxu0 0.0
  %869 = vmatpush1.msra.mxu0 0.0
  %870 = vmatprep.subr.mxu0 0.0
  %871 = vmatpush1.msra.mxu0 0.0
  %872 = vmatprep.subr.mxu0 0.0
  %873 = vmatpush1.msra.mxu0 %v799
  %874 = vmatprep.subr.mxu0 0.0
  %875 = vmatpush2.msra.mxu0 0.0
  %876 = vmatprep.subr.mxu0 0.0
  %877 = vmatpush2.msra.mxu0 0.0
  %878 = vmatprep.subr.mxu0 0.0
  %879 = vmatpush2.msra.mxu0 0.0
  %880 = vmatprep.subr.mxu0 0.0
  %881 = vmatpush2.msra.mxu0 0.0
  %882 = vmatprep.subr.mxu0 0.0
  %883 = vmatpush2.msra.mxu0 0.0
  %884 = vmatprep.subr.mxu0 0.0
  %885 = vmatpush2.msra.mxu0 0.0
  %886 = vmatprep.subr.mxu0 0.0
  %887 = vmatpush2.msra.mxu0 0.0
  %888 = vmatprep.subr.mxu0 0.0
  %889 = vmatpush2.msra.mxu0 0.0
  %890 = vmatprep.subr.mxu0 0.0
  %891 = vmatpush2.msra.mxu0 0.0
  %892 = vmatprep.subr.mxu0 0.0
  %893 = vmatpush2.msra.mxu0 0.0
  %894 = vmatprep.subr.mxu0 0.0
  %895 = vmatpush2.msra.mxu0 0.0
  %896 = vmatprep.subr.mxu0 0.0
  %897 = vmatpush2.msra.mxu0 0.0
  %898 = vmatprep.subr.mxu0 0.0
  %899 = vmatpush2.msra.mxu0 0.0
  %900 = vmatprep.subr.mxu0 0.0
  %901 = vmatpush2.msra.mxu0 0.0
  %902 = vmatprep.subr.mxu0 0.0
  %903 = vmatpush2.msra.mxu0 0.0
  %904 = vmatprep.subr.mxu0 0.0
  %905 = vmatpush2.msra.mxu0 0.0
  %906 = vmatprep.mubr.f32.mxu0 0.0
  %907 = vmatmul.mubr.f32.gmra.mxu0 %v831
  %v908 = vpop.f32.mrf.mxu0
  %v909 = vadd.f32 %v813, %v908
  %v910 = vpop.f32.mrf.mxu0
  %911 = vmatprep.mubr.f32.mxu0 0.0
  %912 = vmatmul.mubr.f32.gmra.mxu0 %v834
  %v913 = vpop.f32.mrf.mxu0
  %v914 = vadd.f32 %v818, %v913
  %v915 = vpop.f32.mrf.mxu0
  %916 = vmatprep.mubr.f32.mxu0 0.0
  %917 = vmatmul.mubr.f32.gmra.mxu0 %v837
  %v918 = vpop.f32.mrf.mxu0
  %v919 = vadd.f32 %v823, %v918
  %v920 = vpop.f32.mrf.mxu0
  %921 = vmatprep.mubr.f32.mxu0 0.0
  %922 = vmatmul.mubr.f32.gmra.mxu0 %v840
  %v923 = vpop.f32.mrf.mxu0
  %v924 = vadd.f32 %v828, %v923
  %v925 = vpop.f32.mrf.mxu0
  %926 = vdwg.mxu0
  %v927 = vmax.f32 %v909, 0.0
  %v928 = vmax.f32 %v914, 0.0
  %v929 = vmax.f32 %v919, 0.0
  %v930 = vmax.f32 %v924, 0.0
  %s931 = scalar_lea.vmem %s7, 32
  %v932 = vld [vmem:[%s931] sm:$0xff]
  %v933 = vld [vmem:[%s931 + $0x8] sm:$0xff]
  %v934 = vld [vmem:[%s931 + $0x10] sm:$0xff]
  %v935 = vld [vmem:[%s931 + $0x18] sm:$0xff]
  %s936 = scalar_lea.vmem %s8, 32
  %v937 = vld [vmem:[%s936] sm:$0xff]
  %v938 = vld [vmem:[%s936 + $0x8] sm:$0xff]
  %v939 = vld [vmem:[%s936 + $0x10] sm:$0xff]
  %v940 = vld [vmem:[%s936 + $0x18] sm:$0xff]
  %942 = vset.pattern.permute.xlu0 0
  %943 = vperm.xlu0 %942, %v937
  %v944 = vpop.permute.xlu0 %943
  %947 = vset.pattern.permute.xlu0 0
  %948 = vperm.xlu0 %947, %v938
  %v949 = vpop.permute.xlu0 %948
  %952 = vset.pattern.permute.xlu0 0
  %953 = vperm.xlu0 %952, %v939
  %v954 = vpop.permute.xlu0 %953
  %957 = vset.pattern.permute.xlu0 0
  %958 = vperm.xlu0 %957, %v940
  %v959 = vpop.permute.xlu0 %958
  %v962 = vsel %vm437, %v932, 0
  %v965 = vsel %vm437, %v933, 0
  %v968 = vsel %vm437, %v934, 0
  %v971 = vsel %vm437, %v935, 0
  %973 = vmatprep.subr.mxu0 0.0
  %974 = vmatpush1.msra.mxu0 0.0
  %975 = vmatprep.subr.mxu0 0.0
  %976 = vmatpush1.msra.mxu0 0.0
  %977 = vmatprep.subr.mxu0 0.0
  %978 = vmatpush1.msra.mxu0 0.0
  %979 = vmatprep.subr.mxu0 0.0
  %980 = vmatpush1.msra.mxu0 0.0
  %981 = vmatprep.subr.mxu0 0.0
  %982 = vmatpush1.msra.mxu0 0.0
  %983 = vmatprep.subr.mxu0 0.0
  %984 = vmatpush1.msra.mxu0 0.0
  %985 = vmatprep.subr.mxu0 0.0
  %986 = vmatpush1.msra.mxu0 0.0
  %987 = vmatprep.subr.mxu0 0.0
  %988 = vmatpush1.msra.mxu0 0.0
  %989 = vmatprep.subr.mxu0 0.0
  %990 = vmatpush1.msra.mxu0 0.0
  %991 = vmatprep.subr.mxu0 0.0
  %992 = vmatpush1.msra.mxu0 0.0
  %993 = vmatprep.subr.mxu0 0.0
  %994 = vmatpush1.msra.mxu0 0.0
  %995 = vmatprep.subr.mxu0 0.0
  %996 = vmatpush1.msra.mxu0 0.0
  %997 = vmatprep.subr.mxu0 0.0
  %998 = vmatpush1.msra.mxu0 %v930
  %999 = vmatprep.subr.mxu0 0.0
  %1000 = vmatpush1.msra.mxu0 %v929
  %1001 = vmatprep.subr.mxu0 0.0
  %1002 = vmatpush1.msra.mxu0 %v928
  %1003 = vmatprep.subr.mxu0 0.0
  %1004 = vmatpush1.msra.mxu0 %v927
  %1005 = vmatprep.subr.mxu0 0.0
  %1006 = vmatpush2.msra.mxu0 0.0
  %1007 = vmatprep.subr.mxu0 0.0
  %1008 = vmatpush2.msra.mxu0 0.0
  %1009 = vmatprep.subr.mxu0 0.0
  %1010 = vmatpush2.msra.mxu0 0.0
  %1011 = vmatprep.subr.mxu0 0.0
  %1012 = vmatpush2.msra.mxu0 0.0
  %1013 = vmatprep.subr.mxu0 0.0
  %1014 = vmatpush2.msra.mxu0 0.0
  %1015 = vmatprep.subr.mxu0 0.0
  %1016 = vmatpush2.msra.mxu0 0.0
  %1017 = vmatprep.subr.mxu0 0.0
  %1018 = vmatpush2.msra.mxu0 0.0
  %1019 = vmatprep.subr.mxu0 0.0
  %1020 = vmatpush2.msra.mxu0 0.0
  %1021 = vmatprep.subr.mxu0 0.0
  %1022 = vmatpush2.msra.mxu0 0.0
  %1023 = vmatprep.subr.mxu0 0.0
  %1024 = vmatpush2.msra.mxu0 0.0
  %1025 = vmatprep.subr.mxu0 0.0
  %1026 = vmatpush2.msra.mxu0 0.0
  %1027 = vmatprep.subr.mxu0 0.0
  %1028 = vmatpush2.msra.mxu0 0.0
  %1029 = vmatprep.subr.mxu0 0.0
  %1030 = vmatpush2.msra.mxu0 0.0
  %1031 = vmatprep.subr.mxu0 0.0
  %1032 = vmatpush2.msra.mxu0 0.0
  %1033 = vmatprep.subr.mxu0 0.0
  %1034 = vmatpush2.msra.mxu0 0.0
  %1035 = vmatprep.subr.mxu0 0.0
  %1036 = vmatpush2.msra.mxu0 0.0
  %1037 = vmatprep.mubr.f32.mxu0 0.0
  %1038 = vmatmul.mubr.f32.gmra.mxu0 %v962
  %v1039 = vpop.f32.mrf.mxu0
  %v1040 = vadd.f32 %v944, %v1039
  %v1041 = vpop.f32.mrf.mxu0
  %1042 = vmatprep.mubr.f32.mxu0 0.0
  %1043 = vmatmul.mubr.f32.gmra.mxu0 %v965
  %v1044 = vpop.f32.mrf.mxu0
  %v1045 = vadd.f32 %v949, %v1044
  %v1046 = vpop.f32.mrf.mxu0
  %1047 = vmatprep.mubr.f32.mxu0 0.0
  %1048 = vmatmul.mubr.f32.gmra.mxu0 %v968
  %v1049 = vpop.f32.mrf.mxu0
  %v1050 = vadd.f32 %v954, %v1049
  %v1051 = vpop.f32.mrf.mxu0
  %1052 = vmatprep.mubr.f32.mxu0 0.0
  %1053 = vmatmul.mubr.f32.gmra.mxu0 %v971
  %v1054 = vpop.f32.mrf.mxu0
  %v1055 = vadd.f32 %v959, %v1054
  %v1056 = vpop.f32.mrf.mxu0
  %1057 = vdwg.mxu0
  %v1058 = vmax.f32 %v1040, 0.0
  %v1059 = vmax.f32 %v1045, 0.0
  %v1060 = vmax.f32 %v1050, 0.0
  %v1061 = vmax.f32 %v1055, 0.0
  %s1062 = scalar_lea.vmem %s9, 8
  %v1063 = vld [vmem:[%s1062] sm:$0xff]
  %s1064 = scalar_lea.vmem %s10, 8
  %v1065 = vld [vmem:[%s1064] sm:$0xff]
  %1067 = vset.pattern.permute.xlu0 0
  %1068 = vperm.xlu0 %1067, %v1065
  %v1069 = vpop.permute.xlu0 %1068
  %v1072 = vsel %vm437, %v1063, 0
  %1074 = vmatprep.subr.mxu0 0.0
  %1075 = vmatpush1.msra.mxu0 0.0
  %1076 = vmatprep.subr.mxu0 0.0
  %1077 = vmatpush1.msra.mxu0 0.0
  %1078 = vmatprep.subr.mxu0 0.0
  %1079 = vmatpush1.msra.mxu0 0.0
  %1080 = vmatprep.subr.mxu0 0.0
  %1081 = vmatpush1.msra.mxu0 0.0
  %1082 = vmatprep.subr.mxu0 0.0
  %1083 = vmatpush1.msra.mxu0 0.0
  %1084 = vmatprep.subr.mxu0 0.0
  %1085 = vmatpush1.msra.mxu0 0.0
  %1086 = vmatprep.subr.mxu0 0.0
  %1087 = vmatpush1.msra.mxu0 0.0
  %1088 = vmatprep.subr.mxu0 0.0
  %1089 = vmatpush1.msra.mxu0 0.0
  %1090 = vmatprep.subr.mxu0 0.0
  %1091 = vmatpush1.msra.mxu0 0.0
  %1092 = vmatprep.subr.mxu0 0.0
  %1093 = vmatpush1.msra.mxu0 0.0
  %1094 = vmatprep.subr.mxu0 0.0
  %1095 = vmatpush1.msra.mxu0 0.0
  %1096 = vmatprep.subr.mxu0 0.0
  %1097 = vmatpush1.msra.mxu0 0.0
  %1098 = vmatprep.subr.mxu0 0.0
  %1099 = vmatpush1.msra.mxu0 %v1061
  %1100 = vmatprep.subr.mxu0 0.0
  %1101 = vmatpush1.msra.mxu0 %v1060
  %1102 = vmatprep.subr.mxu0 0.0
  %1103 = vmatpush1.msra.mxu0 %v1059
  %1104 = vmatprep.subr.mxu0 0.0
  %1105 = vmatpush1.msra.mxu0 %v1058
  %1106 = vmatprep.subr.mxu0 0.0
  %1107 = vmatpush2.msra.mxu0 0.0
  %1108 = vmatprep.subr.mxu0 0.0
  %1109 = vmatpush2.msra.mxu0 0.0
  %1110 = vmatprep.subr.mxu0 0.0
  %1111 = vmatpush2.msra.mxu0 0.0
  %1112 = vmatprep.subr.mxu0 0.0
  %1113 = vmatpush2.msra.mxu0 0.0
  %1114 = vmatprep.subr.mxu0 0.0
  %1115 = vmatpush2.msra.mxu0 0.0
  %1116 = vmatprep.subr.mxu0 0.0
  %1117 = vmatpush2.msra.mxu0 0.0
  %1118 = vmatprep.subr.mxu0 0.0
  %1119 = vmatpush2.msra.mxu0 0.0
  %1120 = vmatprep.subr.mxu0 0.0
  %1121 = vmatpush2.msra.mxu0 0.0
  %1122 = vmatprep.subr.mxu0 0.0
  %1123 = vmatpush2.msra.mxu0 0.0
  %1124 = vmatprep.subr.mxu0 0.0
  %1125 = vmatpush2.msra.mxu0 0.0
  %1126 = vmatprep.subr.mxu0 0.0
  %1127 = vmatpush2.msra.mxu0 0.0
  %1128 = vmatprep.subr.mxu0 0.0
  %1129 = vmatpush2.msra.mxu0 0.0
  %1130 = vmatprep.subr.mxu0 0.0
  %1131 = vmatpush2.msra.mxu0 0.0
  %1132 = vmatprep.subr.mxu0 0.0
  %1133 = vmatpush2.msra.mxu0 0.0
  %1134 = vmatprep.subr.mxu0 0.0
  %1135 = vmatpush2.msra.mxu0 0.0
  %1136 = vmatprep.subr.mxu0 0.0
  %1137 = vmatpush2.msra.mxu0 0.0
  %1138 = vmatprep.mubr.f32.mxu0 0.0
  %1139 = vmatmul.mubr.f32.gmra.mxu0 %v1072
  %v1140 = vpop.f32.mrf.mxu0
  %v1141 = vadd.f32 %v1069, %v1140
  %v1142 = vpop.f32.mrf.mxu0
  %1143 = vdwg.mxu0
  %v1144 = vadd.f32 %v709, %v1141
  %s1145 = scalar_lea.vmem %s1, 32
  %v1146 = vld [vmem:[%s1145] sm:$0xff]
  %v1147 = vld [vmem:[%s1145 + $0x8] sm:$0xff]
  %s1148 = scalar_lea.vmem %s2, 32
  %v1149 = vld [vmem:[%s1148] sm:$0xff]
  %v1150 = vld [vmem:[%s1148 + $0x8] sm:$0xff]
  %1152 = vset.pattern.permute.xlu0 0
  %1153 = vperm.xlu0 %1152, %v1149
  %v1154 = vpop.permute.xlu0 %1153
  %1157 = vset.pattern.permute.xlu0 0
  %1158 = vperm.xlu0 %1157, %v1150
  %v1159 = vpop.permute.xlu0 %1158
  %v1162 = vsel %vm68, %v1146, 0
  %v1165 = vsel %vm68, %v1147, 0
  %1167 = vmatprep.subr.mxu0 0.0
  %1168 = vmatpush1.msra.mxu0 0.0
  %1169 = vmatprep.subr.mxu0 0.0
  %1170 = vmatpush1.msra.mxu0 0.0
  %1171 = vmatprep.subr.mxu0 0.0
  %1172 = vmatpush1.msra.mxu0 0.0
  %1173 = vmatprep.subr.mxu0 0.0
  %1174 = vmatpush1.msra.mxu0 0.0
  %1175 = vmatprep.subr.mxu0 0.0
  %1176 = vmatpush1.msra.mxu0 0.0
  %1177 = vmatprep.subr.mxu0 0.0
  %1178 = vmatpush1.msra.mxu0 0.0
  %1179 = vmatprep.subr.mxu0 0.0
  %1180 = vmatpush1.msra.mxu0 0.0
  %1181 = vmatprep.subr.mxu0 0.0
  %1182 = vmatpush1.msra.mxu0 0.0
  %1183 = vmatprep.subr.mxu0 0.0
  %1184 = vmatpush1.msra.mxu0 0.0
  %1185 = vmatprep.subr.mxu0 0.0
  %1186 = vmatpush1.msra.mxu0 0.0
  %1187 = vmatprep.subr.mxu0 0.0
  %1188 = vmatpush1.msra.mxu0 0.0
  %1189 = vmatprep.subr.mxu0 0.0
  %1190 = vmatpush1.msra.mxu0 0.0
  %1191 = vmatprep.subr.mxu0 0.0
  %1192 = vmatpush1.msra.mxu0 0.0
  %1193 = vmatprep.subr.mxu0 0.0
  %1194 = vmatpush1.msra.mxu0 0.0
  %1195 = vmatprep.subr.mxu0 0.0
  %1196 = vmatpush1.msra.mxu0 %v714
  %1197 = vmatprep.subr.mxu0 0.0
  %1198 = vmatpush1.msra.mxu0 %v1144
  %1199 = vmatprep.subr.mxu0 0.0
  %1200 = vmatpush2.msra.mxu0 0.0
  %1201 = vmatprep.subr.mxu0 0.0
  %1202 = vmatpush2.msra.mxu0 0.0
  %1203 = vmatprep.subr.mxu0 0.0
  %1204 = vmatpush2.msra.mxu0 0.0
  %1205 = vmatprep.subr.mxu0 0.0
  %1206 = vmatpush2.msra.mxu0 0.0
  %1207 = vmatprep.subr.mxu0 0.0
  %1208 = vmatpush2.msra.mxu0 0.0
  %1209 = vmatprep.subr.mxu0 0.0
  %1210 = vmatpush2.msra.mxu0 0.0
  %1211 = vmatprep.subr.mxu0 0.0
  %1212 = vmatpush2.msra.mxu0 0.0
  %1213 = vmatprep.subr.mxu0 0.0
  %1214 = vmatpush2.msra.mxu0 0.0
  %1215 = vmatprep.subr.mxu0 0.0
  %1216 = vmatpush2.msra.mxu0 0.0
  %1217 = vmatprep.subr.mxu0 0.0
  %1218 = vmatpush2.msra.mxu0 0.0
  %1219 = vmatprep.subr.mxu0 0.0
  %1220 = vmatpush2.msra.mxu0 0.0
  %1221 = vmatprep.subr.mxu0 0.0
  %1222 = vmatpush2.msra.mxu0 0.0
  %1223 = vmatprep.subr.mxu0 0.0
  %1224 = vmatpush2.msra.mxu0 0.0
  %1225 = vmatprep.subr.mxu0 0.0
  %1226 = vmatpush2.msra.mxu0 0.0
  %1227 = vmatprep.subr.mxu0 0.0
  %1228 = vmatpush2.msra.mxu0 0.0
  %1229 = vmatprep.subr.mxu0 0.0
  %1230 = vmatpush2.msra.mxu0 0.0
  %1231 = vmatprep.mubr.f32.mxu0 0.0
  %1232 = vmatmul.mubr.f32.gmra.mxu0 %v1162
  %v1233 = vpop.f32.mrf.mxu0
  %v1234 = vadd.f32 %v1154, %v1233
  %v1235 = vpop.f32.mrf.mxu0
  %1236 = vmatprep.mubr.f32.mxu0 0.0
  %1237 = vmatmul.mubr.f32.gmra.mxu0 %v1165
  %v1238 = vpop.f32.mrf.mxu0
  %v1239 = vadd.f32 %v1159, %v1238
  %v1240 = vpop.f32.mrf.mxu0
  %1241 = vdwg.mxu0
  %s1242 = scalar_lea.vmem %s3, 16
  %v1243 = vld [vmem:[%s1242] sm:$0xff]
  %s1244 = scalar_lea.vmem %s4, 16
  %v1245 = vld [vmem:[%s1244] sm:$0xff]
  %1247 = vset.pattern.permute.xlu0 0
  %1248 = vperm.xlu0 %1247, %v1245
  %v1249 = vpop.permute.xlu0 %1248
  %v1252 = vsel %vm68, %v1243, 0
  %1254 = vmatprep.subr.mxu0 0.0
  %1255 = vmatpush1.msra.mxu0 0.0
  %1256 = vmatprep.subr.mxu0 0.0
  %1257 = vmatpush1.msra.mxu0 0.0
  %1258 = vmatprep.subr.mxu0 0.0
  %1259 = vmatpush1.msra.mxu0 0.0
  %1260 = vmatprep.subr.mxu0 0.0
  %1261 = vmatpush1.msra.mxu0 0.0
  %1262 = vmatprep.subr.mxu0 0.0
  %1263 = vmatpush1.msra.mxu0 0.0
  %1264 = vmatprep.subr.mxu0 0.0
  %1265 = vmatpush1.msra.mxu0 0.0
  %1266 = vmatprep.subr.mxu0 0.0
  %1267 = vmatpush1.msra.mxu0 0.0
  %1268 = vmatprep.subr.mxu0 0.0
  %1269 = vmatpush1.msra.mxu0 0.0
  %1270 = vmatprep.subr.mxu0 0.0
  %1271 = vmatpush1.msra.mxu0 0.0
  %1272 = vmatprep.subr.mxu0 0.0
  %1273 = vmatpush1.msra.mxu0 0.0
  %1274 = vmatprep.subr.mxu0 0.0
  %1275 = vmatpush1.msra.mxu0 0.0
  %1276 = vmatprep.subr.mxu0 0.0
  %1277 = vmatpush1.msra.mxu0 0.0
  %1278 = vmatprep.subr.mxu0 0.0
  %1279 = vmatpush1.msra.mxu0 0.0
  %1280 = vmatprep.subr.mxu0 0.0
  %1281 = vmatpush1.msra.mxu0 0.0
  %1282 = vmatprep.subr.mxu0 0.0
  %1283 = vmatpush1.msra.mxu0 %v714
  %1284 = vmatprep.subr.mxu0 0.0
  %1285 = vmatpush1.msra.mxu0 %v1144
  %1286 = vmatprep.subr.mxu0 0.0
  %1287 = vmatpush2.msra.mxu0 0.0
  %1288 = vmatprep.subr.mxu0 0.0
  %1289 = vmatpush2.msra.mxu0 0.0
  %1290 = vmatprep.subr.mxu0 0.0
  %1291 = vmatpush2.msra.mxu0 0.0
  %1292 = vmatprep.subr.mxu0 0.0
  %1293 = vmatpush2.msra.mxu0 0.0
  %1294 = vmatprep.subr.mxu0 0.0
  %1295 = vmatpush2.msra.mxu0 0.0
  %1296 = vmatprep.subr.mxu0 0.0
  %1297 = vmatpush2.msra.mxu0 0.0
  %1298 = vmatprep.subr.mxu0 0.0
  %1299 = vmatpush2.msra.mxu0 0.0
  %1300 = vmatprep.subr.mxu0 0.0
  %1301 = vmatpush2.msra.mxu0 0.0
  %1302 = vmatprep.subr.mxu0 0.0
  %1303 = vmatpush2.msra.mxu0 0.0
  %1304 = vmatprep.subr.mxu0 0.0
  %1305 = vmatpush2.msra.mxu0 0.0
  %1306 = vmatprep.subr.mxu0 0.0
  %1307 = vmatpush2.msra.mxu0 0.0
  %1308 = vmatprep.subr.mxu0 0.0
  %1309 = vmatpush2.msra.mxu0 0.0
  %1310 = vmatprep.subr.mxu0 0.0
  %1311 = vmatpush2.msra.mxu0 0.0
  %1312 = vmatprep.subr.mxu0 0.0
  %1313 = vmatpush2.msra.mxu0 0.0
  %1314 = vmatprep.subr.mxu0 0.0
  %1315 = vmatpush2.msra.mxu0 0.0
  %1316 = vmatprep.subr.mxu0 0.0
  %1317 = vmatpush2.msra.mxu0 0.0
  %1318 = vmatprep.mubr.f32.mxu0 0.0
  %1319 = vmatmul.mubr.f32.gmra.mxu0 %v1252
  %v1320 = vpop.f32.mrf.mxu0
  %v1321 = vadd.f32 %v1249, %v1320
  %v1322 = vpop.f32.mrf.mxu0
  %1323 = vdwg.mxu0
  %v1324 = vmax.f32 %v1321, 0.0
  %s1325 = scalar_lea.vmem %s5, 64
  %v1326 = vld [vmem:[%s1325] sm:$0xff]
  %v1327 = vld [vmem:[%s1325 + $0x8] sm:$0xff]
  %v1328 = vld [vmem:[%s1325 + $0x10] sm:$0xff]
  %v1329 = vld [vmem:[%s1325 + $0x18] sm:$0xff]
  %s1330 = scalar_lea.vmem %s6, 64
  %v1331 = vld [vmem:[%s1330] sm:$0xff]
  %v1332 = vld [vmem:[%s1330 + $0x8] sm:$0xff]
  %v1333 = vld [vmem:[%s1330 + $0x10] sm:$0xff]
  %v1334 = vld [vmem:[%s1330 + $0x18] sm:$0xff]
  %1336 = vset.pattern.permute.xlu0 0
  %1337 = vperm.xlu0 %1336, %v1331
  %v1338 = vpop.permute.xlu0 %1337
  %1341 = vset.pattern.permute.xlu0 0
  %1342 = vperm.xlu0 %1341, %v1332
  %v1343 = vpop.permute.xlu0 %1342
  %1346 = vset.pattern.permute.xlu0 0
  %1347 = vperm.xlu0 %1346, %v1333
  %v1348 = vpop.permute.xlu0 %1347
  %1351 = vset.pattern.permute.xlu0 0
  %1352 = vperm.xlu0 %1351, %v1334
  %v1353 = vpop.permute.xlu0 %1352
  %v1356 = vsel %vm307, %v1326, 0
  %v1359 = vsel %vm307, %v1327, 0
  %v1362 = vsel %vm307, %v1328, 0
  %v1365 = vsel %vm307, %v1329, 0
  %1367 = vmatprep.subr.mxu0 0.0
  %1368 = vmatpush1.msra.mxu0 0.0
  %1369 = vmatprep.subr.mxu0 0.0
  %1370 = vmatpush1.msra.mxu0 0.0
  %1371 = vmatprep.subr.mxu0 0.0
  %1372 = vmatpush1.msra.mxu0 0.0
  %1373 = vmatprep.subr.mxu0 0.0
  %1374 = vmatpush1.msra.mxu0 0.0
  %1375 = vmatprep.subr.mxu0 0.0
  %1376 = vmatpush1.msra.mxu0 0.0
  %1377 = vmatprep.subr.mxu0 0.0
  %1378 = vmatpush1.msra.mxu0 0.0
  %1379 = vmatprep.subr.mxu0 0.0
  %1380 = vmatpush1.msra.mxu0 0.0
  %1381 = vmatprep.subr.mxu0 0.0
  %1382 = vmatpush1.msra.mxu0 0.0
  %1383 = vmatprep.subr.mxu0 0.0
  %1384 = vmatpush1.msra.mxu0 0.0
  %1385 = vmatprep.subr.mxu0 0.0
  %1386 = vmatpush1.msra.mxu0 0.0
  %1387 = vmatprep.subr.mxu0 0.0
  %1388 = vmatpush1.msra.mxu0 0.0
  %1389 = vmatprep.subr.mxu0 0.0
  %1390 = vmatpush1.msra.mxu0 0.0
  %1391 = vmatprep.subr.mxu0 0.0
  %1392 = vmatpush1.msra.mxu0 0.0
  %1393 = vmatprep.subr.mxu0 0.0
  %1394 = vmatpush1.msra.mxu0 0.0
  %1395 = vmatprep.subr.mxu0 0.0
  %1396 = vmatpush1.msra.mxu0 0.0
  %1397 = vmatprep.subr.mxu0 0.0
  %1398 = vmatpush1.msra.mxu0 %v1324
  %1399 = vmatprep.subr.mxu0 0.0
  %1400 = vmatpush2.msra.mxu0 0.0
  %1401 = vmatprep.subr.mxu0 0.0
  %1402 = vmatpush2.msra.mxu0 0.0
  %1403 = vmatprep.subr.mxu0 0.0
  %1404 = vmatpush2.msra.mxu0 0.0
  %1405 = vmatprep.subr.mxu0 0.0
  %1406 = vmatpush2.msra.mxu0 0.0
  %1407 = vmatprep.subr.mxu0 0.0
  %1408 = vmatpush2.msra.mxu0 0.0
  %1409 = vmatprep.subr.mxu0 0.0
  %1410 = vmatpush2.msra.mxu0 0.0
  %1411 = vmatprep.subr.mxu0 0.0
  %1412 = vmatpush2.msra.mxu0 0.0
  %1413 = vmatprep.subr.mxu0 0.0
  %1414 = vmatpush2.msra.mxu0 0.0
  %1415 = vmatprep.subr.mxu0 0.0
  %1416 = vmatpush2.msra.mxu0 0.0
  %1417 = vmatprep.subr.mxu0 0.0
  %1418 = vmatpush2.msra.mxu0 0.0
  %1419 = vmatprep.subr.mxu0 0.0
  %1420 = vmatpush2.msra.mxu0 0.0
  %1421 = vmatprep.subr.mxu0 0.0
  %1422 = vmatpush2.msra.mxu0 0.0
  %1423 = vmatprep.subr.mxu0 0.0
  %1424 = vmatpush2.msra.mxu0 0.0
  %1425 = vmatprep.subr.mxu0 0.0
  %1426 = vmatpush2.msra.mxu0 0.0
  %1427 = vmatprep.subr.mxu0 0.0
  %1428 = vmatpush2.msra.mxu0 0.0
  %1429 = vmatprep.subr.mxu0 0.0
  %1430 = vmatpush2.msra.mxu0 0.0
  %1431 = vmatprep.mubr.f32.mxu0 0.0
  %1432 = vmatmul.mubr.f32.gmra.mxu0 %v1356
  %v1433 = vpop.f32.mrf.mxu0
  %v1434 = vadd.f32 %v1338, %v1433
  %v1435 = vpop.f32.mrf.mxu0
  %1436 = vmatprep.mubr.f32.mxu0 0.0
  %1437 = vmatmul.mubr.f32.gmra.mxu0 %v1359
  %v1438 = vpop.f32.mrf.mxu0
  %v1439 = vadd.f32 %v1343, %v1438
  %v1440 = vpop.f32.mrf.mxu0
  %1441 = vmatprep.mubr.f32.mxu0 0.0
  %1442 = vmatmul.mubr.f32.gmra.mxu0 %v1362
  %v1443 = vpop.f32.mrf.mxu0
  %v1444 = vadd.f32 %v1348, %v1443
  %v1445 = vpop.f32.mrf.mxu0
  %1446 = vmatprep.mubr.f32.mxu0 0.0
  %1447 = vmatmul.mubr.f32.gmra.mxu0 %v1365
  %v1448 = vpop.f32.mrf.mxu0
  %v1449 = vadd.f32 %v1353, %v1448
  %v1450 = vpop.f32.mrf.mxu0
  %1451 = vdwg.mxu0
  %v1452 = vmax.f32 %v1434, 0.0
  %v1453 = vmax.f32 %v1439, 0.0
  %v1454 = vmax.f32 %v1444, 0.0
  %v1455 = vmax.f32 %v1449, 0.0
  %s1456 = scalar_lea.vmem %s7, 64
  %v1457 = vld [vmem:[%s1456] sm:$0xff]
  %v1458 = vld [vmem:[%s1456 + $0x8] sm:$0xff]
  %v1459 = vld [vmem:[%s1456 + $0x10] sm:$0xff]
  %v1460 = vld [vmem:[%s1456 + $0x18] sm:$0xff]
  %s1461 = scalar_lea.vmem %s8, 64
  %v1462 = vld [vmem:[%s1461] sm:$0xff]
  %v1463 = vld [vmem:[%s1461 + $0x8] sm:$0xff]
  %v1464 = vld [vmem:[%s1461 + $0x10] sm:$0xff]
  %v1465 = vld [vmem:[%s1461 + $0x18] sm:$0xff]
  %1467 = vset.pattern.permute.xlu0 0
  %1468 = vperm.xlu0 %1467, %v1462
  %v1469 = vpop.permute.xlu0 %1468
  %1472 = vset.pattern.permute.xlu0 0
  %1473 = vperm.xlu0 %1472, %v1463
  %v1474 = vpop.permute.xlu0 %1473
  %1477 = vset.pattern.permute.xlu0 0
  %1478 = vperm.xlu0 %1477, %v1464
  %v1479 = vpop.permute.xlu0 %1478
  %1482 = vset.pattern.permute.xlu0 0
  %1483 = vperm.xlu0 %1482, %v1465
  %v1484 = vpop.permute.xlu0 %1483
  %v1487 = vsel %vm437, %v1457, 0
  %v1490 = vsel %vm437, %v1458, 0
  %v1493 = vsel %vm437, %v1459, 0
  %v1496 = vsel %vm437, %v1460, 0
  %1498 = vmatprep.subr.mxu0 0.0
  %1499 = vmatpush1.msra.mxu0 0.0
  %1500 = vmatprep.subr.mxu0 0.0
  %1501 = vmatpush1.msra.mxu0 0.0
  %1502 = vmatprep.subr.mxu0 0.0
  %1503 = vmatpush1.msra.mxu0 0.0
  %1504 = vmatprep.subr.mxu0 0.0
  %1505 = vmatpush1.msra.mxu0 0.0
  %1506 = vmatprep.subr.mxu0 0.0
  %1507 = vmatpush1.msra.mxu0 0.0
  %1508 = vmatprep.subr.mxu0 0.0
  %1509 = vmatpush1.msra.mxu0 0.0
  %1510 = vmatprep.subr.mxu0 0.0
  %1511 = vmatpush1.msra.mxu0 0.0
  %1512 = vmatprep.subr.mxu0 0.0
  %1513 = vmatpush1.msra.mxu0 0.0
  %1514 = vmatprep.subr.mxu0 0.0
  %1515 = vmatpush1.msra.mxu0 0.0
  %1516 = vmatprep.subr.mxu0 0.0
  %1517 = vmatpush1.msra.mxu0 0.0
  %1518 = vmatprep.subr.mxu0 0.0
  %1519 = vmatpush1.msra.mxu0 0.0
  %1520 = vmatprep.subr.mxu0 0.0
  %1521 = vmatpush1.msra.mxu0 0.0
  %1522 = vmatprep.subr.mxu0 0.0
  %1523 = vmatpush1.msra.mxu0 %v1455
  %1524 = vmatprep.subr.mxu0 0.0
  %1525 = vmatpush1.msra.mxu0 %v1454
  %1526 = vmatprep.subr.mxu0 0.0
  %1527 = vmatpush1.msra.mxu0 %v1453
  %1528 = vmatprep.subr.mxu0 0.0
  %1529 = vmatpush1.msra.mxu0 %v1452
  %1530 = vmatprep.subr.mxu0 0.0
  %1531 = vmatpush2.msra.mxu0 0.0
  %1532 = vmatprep.subr.mxu0 0.0
  %1533 = vmatpush2.msra.mxu0 0.0
  %1534 = vmatprep.subr.mxu0 0.0
  %1535 = vmatpush2.msra.mxu0 0.0
  %1536 = vmatprep.subr.mxu0 0.0
  %1537 = vmatpush2.msra.mxu0 0.0
  %1538 = vmatprep.subr.mxu0 0.0
  %1539 = vmatpush2.msra.mxu0 0.0
  %1540 = vmatprep.subr.mxu0 0.0
  %1541 = vmatpush2.msra.mxu0 0.0
  %1542 = vmatprep.subr.mxu0 0.0
  %1543 = vmatpush2.msra.mxu0 0.0
  %1544 = vmatprep.subr.mxu0 0.0
  %1545 = vmatpush2.msra.mxu0 0.0
  %1546 = vmatprep.subr.mxu0 0.0
  %1547 = vmatpush2.msra.mxu0 0.0
  %1548 = vmatprep.subr.mxu0 0.0
  %1549 = vmatpush2.msra.mxu0 0.0
  %1550 = vmatprep.subr.mxu0 0.0
  %1551 = vmatpush2.msra.mxu0 0.0
  %1552 = vmatprep.subr.mxu0 0.0
  %1553 = vmatpush2.msra.mxu0 0.0
  %1554 = vmatprep.subr.mxu0 0.0
  %1555 = vmatpush2.msra.mxu0 0.0
  %1556 = vmatprep.subr.mxu0 0.0
  %1557 = vmatpush2.msra.mxu0 0.0
  %1558 = vmatprep.subr.mxu0 0.0
  %1559 = vmatpush2.msra.mxu0 0.0
  %1560 = vmatprep.subr.mxu0 0.0
  %1561 = vmatpush2.msra.mxu0 0.0
  %1562 = vmatprep.mubr.f32.mxu0 0.0
  %1563 = vmatmul.mubr.f32.gmra.mxu0 %v1487
  %v1564 = vpop.f32.mrf.mxu0
  %v1565 = vadd.f32 %v1469, %v1564
  %v1566 = vpop.f32.mrf.mxu0
  %1567 = vmatprep.mubr.f32.mxu0 0.0
  %1568 = vmatmul.mubr.f32.gmra.mxu0 %v1490
  %v1569 = vpop.f32.mrf.mxu0
  %v1570 = vadd.f32 %v1474, %v1569
  %v1571 = vpop.f32.mrf.mxu0
  %1572 = vmatprep.mubr.f32.mxu0 0.0
  %1573 = vmatmul.mubr.f32.gmra.mxu0 %v1493
  %v1574 = vpop.f32.mrf.mxu0
  %v1575 = vadd.f32 %v1479, %v1574
  %v1576 = vpop.f32.mrf.mxu0
  %1577 = vmatprep.mubr.f32.mxu0 0.0
  %1578 = vmatmul.mubr.f32.gmra.mxu0 %v1496
  %v1579 = vpop.f32.mrf.mxu0
  %v1580 = vadd.f32 %v1484, %v1579
  %v1581 = vpop.f32.mrf.mxu0
  %1582 = vdwg.mxu0
  %v1583 = vmax.f32 %v1565, 0.0
  %v1584 = vmax.f32 %v1570, 0.0
  %v1585 = vmax.f32 %v1575, 0.0
  %v1586 = vmax.f32 %v1580, 0.0
  %s1587 = scalar_lea.vmem %s9, 16
  %v1588 = vld [vmem:[%s1587] sm:$0xff]
  %s1589 = scalar_lea.vmem %s10, 16
  %v1590 = vld [vmem:[%s1589] sm:$0xff]
  %1592 = vset.pattern.permute.xlu0 0
  %1593 = vperm.xlu0 %1592, %v1590
  %v1594 = vpop.permute.xlu0 %1593
  %v1597 = vsel %vm437, %v1588, 0
  %1599 = vmatprep.subr.mxu0 0.0
  %1600 = vmatpush1.msra.mxu0 0.0
  %1601 = vmatprep.subr.mxu0 0.0
  %1602 = vmatpush1.msra.mxu0 0.0
  %1603 = vmatprep.subr.mxu0 0.0
  %1604 = vmatpush1.msra.mxu0 0.0
  %1605 = vmatprep.subr.mxu0 0.0
  %1606 = vmatpush1.msra.mxu0 0.0
  %1607 = vmatprep.subr.mxu0 0.0
  %1608 = vmatpush1.msra.mxu0 0.0
  %1609 = vmatprep.subr.mxu0 0.0
  %1610 = vmatpush1.msra.mxu0 0.0
  %1611 = vmatprep.subr.mxu0 0.0
  %1612 = vmatpush1.msra.mxu0 0.0
  %1613 = vmatprep.subr.mxu0 0.0
  %1614 = vmatpush1.msra.mxu0 0.0
  %1615 = vmatprep.subr.mxu0 0.0
  %1616 = vmatpush1.msra.mxu0 0.0
  %1617 = vmatprep.subr.mxu0 0.0
  %1618 = vmatpush1.msra.mxu0 0.0
  %1619 = vmatprep.subr.mxu0 0.0
  %1620 = vmatpush1.msra.mxu0 0.0
  %1621 = vmatprep.subr.mxu0 0.0
  %1622 = vmatpush1.msra.mxu0 0.0
  %1623 = vmatprep.subr.mxu0 0.0
  %1624 = vmatpush1.msra.mxu0 %v1586
  %1625 = vmatprep.subr.mxu0 0.0
  %1626 = vmatpush1.msra.mxu0 %v1585
  %1627 = vmatprep.subr.mxu0 0.0
  %1628 = vmatpush1.msra.mxu0 %v1584
  %1629 = vmatprep.subr.mxu0 0.0
  %1630 = vmatpush1.msra.mxu0 %v1583
  %1631 = vmatprep.subr.mxu0 0.0
  %1632 = vmatpush2.msra.mxu0 0.0
  %1633 = vmatprep.subr.mxu0 0.0
  %1634 = vmatpush2.msra.mxu0 0.0
  %1635 = vmatprep.subr.mxu0 0.0
  %1636 = vmatpush2.msra.mxu0 0.0
  %1637 = vmatprep.subr.mxu0 0.0
  %1638 = vmatpush2.msra.mxu0 0.0
  %1639 = vmatprep.subr.mxu0 0.0
  %1640 = vmatpush2.msra.mxu0 0.0
  %1641 = vmatprep.subr.mxu0 0.0
  %1642 = vmatpush2.msra.mxu0 0.0
  %1643 = vmatprep.subr.mxu0 0.0
  %1644 = vmatpush2.msra.mxu0 0.0
  %1645 = vmatprep.subr.mxu0 0.0
  %1646 = vmatpush2.msra.mxu0 0.0
  %1647 = vmatprep.subr.mxu0 0.0
  %1648 = vmatpush2.msra.mxu0 0.0
  %1649 = vmatprep.subr.mxu0 0.0
  %1650 = vmatpush2.msra.mxu0 0.0
  %1651 = vmatprep.subr.mxu0 0.0
  %1652 = vmatpush2.msra.mxu0 0.0
  %1653 = vmatprep.subr.mxu0 0.0
  %1654 = vmatpush2.msra.mxu0 0.0
  %1655 = vmatprep.subr.mxu0 0.0
  %1656 = vmatpush2.msra.mxu0 0.0
  %1657 = vmatprep.subr.mxu0 0.0
  %1658 = vmatpush2.msra.mxu0 0.0
  %1659 = vmatprep.subr.mxu0 0.0
  %1660 = vmatpush2.msra.mxu0 0.0
  %1661 = vmatprep.subr.mxu0 0.0
  %1662 = vmatpush2.msra.mxu0 0.0
  %1663 = vmatprep.mubr.f32.mxu0 0.0
  %1664 = vmatmul.mubr.f32.gmra.mxu0 %v1597
  %v1665 = vpop.f32.mrf.mxu0
  %v1666 = vadd.f32 %v1594, %v1665
  %v1667 = vpop.f32.mrf.mxu0
  %1668 = vdwg.mxu0
  %v1669 = vadd.f32 %v1234, %v1666
  %s1670 = scalar_lea.vmem %s1, 48
  %v1671 = vld [vmem:[%s1670] sm:$0xff]
  %v1672 = vld [vmem:[%s1670 + $0x8] sm:$0xff]
  %s1673 = scalar_lea.vmem %s2, 48
  %v1674 = vld [vmem:[%s1673] sm:$0xff]
  %v1675 = vld [vmem:[%s1673 + $0x8] sm:$0xff]
  %1677 = vset.pattern.permute.xlu0 0
  %1678 = vperm.xlu0 %1677, %v1674
  %v1679 = vpop.permute.xlu0 %1678
  %1682 = vset.pattern.permute.xlu0 0
  %1683 = vperm.xlu0 %1682, %v1675
  %v1684 = vpop.permute.xlu0 %1683
  %v1687 = vsel %vm68, %v1671, 0
  %v1690 = vsel %vm68, %v1672, 0
  %1692 = vmatprep.subr.mxu0 0.0
  %1693 = vmatpush1.msra.mxu0 0.0
  %1694 = vmatprep.subr.mxu0 0.0
  %1695 = vmatpush1.msra.mxu0 0.0
  %1696 = vmatprep.subr.mxu0 0.0
  %1697 = vmatpush1.msra.mxu0 0.0
  %1698 = vmatprep.subr.mxu0 0.0
  %1699 = vmatpush1.msra.mxu0 0.0
  %1700 = vmatprep.subr.mxu0 0.0
  %1701 = vmatpush1.msra.mxu0 0.0
  %1702 = vmatprep.subr.mxu0 0.0
  %1703 = vmatpush1.msra.mxu0 0.0
  %1704 = vmatprep.subr.mxu0 0.0
  %1705 = vmatpush1.msra.mxu0 0.0
  %1706 = vmatprep.subr.mxu0 0.0
  %1707 = vmatpush1.msra.mxu0 0.0
  %1708 = vmatprep.subr.mxu0 0.0
  %1709 = vmatpush1.msra.mxu0 0.0
  %1710 = vmatprep.subr.mxu0 0.0
  %1711 = vmatpush1.msra.mxu0 0.0
  %1712 = vmatprep.subr.mxu0 0.0
  %1713 = vmatpush1.msra.mxu0 0.0
  %1714 = vmatprep.subr.mxu0 0.0
  %1715 = vmatpush1.msra.mxu0 0.0
  %1716 = vmatprep.subr.mxu0 0.0
  %1717 = vmatpush1.msra.mxu0 0.0
  %1718 = vmatprep.subr.mxu0 0.0
  %1719 = vmatpush1.msra.mxu0 0.0
  %1720 = vmatprep.subr.mxu0 0.0
  %1721 = vmatpush1.msra.mxu0 %v1239
  %1722 = vmatprep.subr.mxu0 0.0
  %1723 = vmatpush1.msra.mxu0 %v1669
  %1724 = vmatprep.subr.mxu0 0.0
  %1725 = vmatpush2.msra.mxu0 0.0
  %1726 = vmatprep.subr.mxu0 0.0
  %1727 = vmatpush2.msra.mxu0 0.0
  %1728 = vmatprep.subr.mxu0 0.0
  %1729 = vmatpush2.msra.mxu0 0.0
  %1730 = vmatprep.subr.mxu0 0.0
  %1731 = vmatpush2.msra.mxu0 0.0
  %1732 = vmatprep.subr.mxu0 0.0
  %1733 = vmatpush2.msra.mxu0 0.0
  %1734 = vmatprep.subr.mxu0 0.0
  %1735 = vmatpush2.msra.mxu0 0.0
  %1736 = vmatprep.subr.mxu0 0.0
  %1737 = vmatpush2.msra.mxu0 0.0
  %1738 = vmatprep.subr.mxu0 0.0
  %1739 = vmatpush2.msra.mxu0 0.0
  %1740 = vmatprep.subr.mxu0 0.0
  %1741 = vmatpush2.msra.mxu0 0.0
  %1742 = vmatprep.subr.mxu0 0.0
  %1743 = vmatpush2.msra.mxu0 0.0
  %1744 = vmatprep.subr.mxu0 0.0
  %1745 = vmatpush2.msra.mxu0 0.0
  %1746 = vmatprep.subr.mxu0 0.0
  %1747 = vmatpush2.msra.mxu0 0.0
  %1748 = vmatprep.subr.mxu0 0.0
  %1749 = vmatpush2.msra.mxu0 0.0
  %1750 = vmatprep.subr.mxu0 0.0
  %1751 = vmatpush2.msra.mxu0 0.0
  %1752 = vmatprep.subr.mxu0 0.0
  %1753 = vmatpush2.msra.mxu0 0.0
  %1754 = vmatprep.subr.mxu0 0.0
  %1755 = vmatpush2.msra.mxu0 0.0
  %1756 = vmatprep.mubr.f32.mxu0 0.0
  %1757 = vmatmul.mubr.f32.gmra.mxu0 %v1687
  %v1758 = vpop.f32.mrf.mxu0
  %v1759 = vadd.f32 %v1679, %v1758
  %v1760 = vpop.f32.mrf.mxu0
  %1761 = vmatprep.mubr.f32.mxu0 0.0
  %1762 = vmatmul.mubr.f32.gmra.mxu0 %v1690
  %v1763 = vpop.f32.mrf.mxu0
  %v1764 = vadd.f32 %v1684, %v1763
  %v1765 = vpop.f32.mrf.mxu0
  %1766 = vdwg.mxu0
  %s1767 = scalar_lea.vmem %s3, 24
  %v1768 = vld [vmem:[%s1767] sm:$0xff]
  %s1769 = scalar_lea.vmem %s4, 24
  %v1770 = vld [vmem:[%s1769] sm:$0xff]
  %1772 = vset.pattern.permute.xlu0 0
  %1773 = vperm.xlu0 %1772, %v1770
  %v1774 = vpop.permute.xlu0 %1773
  %v1777 = vsel %vm68, %v1768, 0
  %1779 = vmatprep.subr.mxu0 0.0
  %1780 = vmatpush1.msra.mxu0 0.0
  %1781 = vmatprep.subr.mxu0 0.0
  %1782 = vmatpush1.msra.mxu0 0.0
  %1783 = vmatprep.subr.mxu0 0.0
  %1784 = vmatpush1.msra.mxu0 0.0
  %1785 = vmatprep.subr.mxu0 0.0
  %1786 = vmatpush1.msra.mxu0 0.0
  %1787 = vmatprep.subr.mxu0 0.0
  %1788 = vmatpush1.msra.mxu0 0.0
  %1789 = vmatprep.subr.mxu0 0.0
  %1790 = vmatpush1.msra.mxu0 0.0
  %1791 = vmatprep.subr.mxu0 0.0
  %1792 = vmatpush1.msra.mxu0 0.0
  %1793 = vmatprep.subr.mxu0 0.0
  %1794 = vmatpush1.msra.mxu0 0.0
  %1795 = vmatprep.subr.mxu0 0.0
  %1796 = vmatpush1.msra.mxu0 0.0
  %1797 = vmatprep.subr.mxu0 0.0
  %1798 = vmatpush1.msra.mxu0 0.0
  %1799 = vmatprep.subr.mxu0 0.0
  %1800 = vmatpush1.msra.mxu0 0.0
  %1801 = vmatprep.subr.mxu0 0.0
  %1802 = vmatpush1.msra.mxu0 0.0
  %1803 = vmatprep.subr.mxu0 0.0
  %1804 = vmatpush1.msra.mxu0 0.0
  %1805 = vmatprep.subr.mxu0 0.0
  %1806 = vmatpush1.msra.mxu0 0.0
  %1807 = vmatprep.subr.mxu0 0.0
  %1808 = vmatpush1.msra.mxu0 %v1239
  %1809 = vmatprep.subr.mxu0 0.0
  %1810 = vmatpush1.msra.mxu0 %v1669
  %1811 = vmatprep.subr.mxu0 0.0
  %1812 = vmatpush2.msra.mxu0 0.0
  %1813 = vmatprep.subr.mxu0 0.0
  %1814 = vmatpush2.msra.mxu0 0.0
  %1815 = vmatprep.subr.mxu0 0.0
  %1816 = vmatpush2.msra.mxu0 0.0
  %1817 = vmatprep.subr.mxu0 0.0
  %1818 = vmatpush2.msra.mxu0 0.0
  %1819 = vmatprep.subr.mxu0 0.0
  %1820 = vmatpush2.msra.mxu0 0.0
  %1821 = vmatprep.subr.mxu0 0.0
  %1822 = vmatpush2.msra.mxu0 0.0
  %1823 = vmatprep.subr.mxu0 0.0
  %1824 = vmatpush2.msra.mxu0 0.0
  %1825 = vmatprep.subr.mxu0 0.0
  %1826 = vmatpush2.msra.mxu0 0.0
  %1827 = vmatprep.subr.mxu0 0.0
  %1828 = vmatpush2.msra.mxu0 0.0
  %1829 = vmatprep.subr.mxu0 0.0
  %1830 = vmatpush2.msra.mxu0 0.0
  %1831 = vmatprep.subr.mxu0 0.0
  %1832 = vmatpush2.msra.mxu0 0.0
  %1833 = vmatprep.subr.mxu0 0.0
  %1834 = vmatpush2.msra.mxu0 0.0
  %1835 = vmatprep.subr.mxu0 0.0
  %1836 = vmatpush2.msra.mxu0 0.0
  %1837 = vmatprep.subr.mxu0 0.0
  %1838 = vmatpush2.msra.mxu0 0.0
  %1839 = vmatprep.subr.mxu0 0.0
  %1840 = vmatpush2.msra.mxu0 0.0
  %1841 = vmatprep.subr.mxu0 0.0
  %1842 = vmatpush2.msra.mxu0 0.0
  %1843 = vmatprep.mubr.f32.mxu0 0.0
  %1844 = vmatmul.mubr.f32.gmra.mxu0 %v1777
  %v1845 = vpop.f32.mrf.mxu0
  %v1846 = vadd.f32 %v1774, %v1845
  %v1847 = vpop.f32.mrf.mxu0
  %1848 = vdwg.mxu0
  %v1849 = vmax.f32 %v1846, 0.0
  %s1850 = scalar_lea.vmem %s5, 96
  %v1851 = vld [vmem:[%s1850] sm:$0xff]
  %v1852 = vld [vmem:[%s1850 + $0x8] sm:$0xff]
  %v1853 = vld [vmem:[%s1850 + $0x10] sm:$0xff]
  %v1854 = vld [vmem:[%s1850 + $0x18] sm:$0xff]
  %s1855 = scalar_lea.vmem %s6, 96
  %v1856 = vld [vmem:[%s1855] sm:$0xff]
  %v1857 = vld [vmem:[%s1855 + $0x8] sm:$0xff]
  %v1858 = vld [vmem:[%s1855 + $0x10] sm:$0xff]
  %v1859 = vld [vmem:[%s1855 + $0x18] sm:$0xff]
  %1861 = vset.pattern.permute.xlu0 0
  %1862 = vperm.xlu0 %1861, %v1856
  %v1863 = vpop.permute.xlu0 %1862
  %1866 = vset.pattern.permute.xlu0 0
  %1867 = vperm.xlu0 %1866, %v1857
  %v1868 = vpop.permute.xlu0 %1867
  %1871 = vset.pattern.permute.xlu0 0
  %1872 = vperm.xlu0 %1871, %v1858
  %v1873 = vpop.permute.xlu0 %1872
  %1876 = vset.pattern.permute.xlu0 0
  %1877 = vperm.xlu0 %1876, %v1859
  %v1878 = vpop.permute.xlu0 %1877
  %v1881 = vsel %vm307, %v1851, 0
  %v1884 = vsel %vm307, %v1852, 0
  %v1887 = vsel %vm307, %v1853, 0
  %v1890 = vsel %vm307, %v1854, 0
  %1892 = vmatprep.subr.mxu0 0.0
  %1893 = vmatpush1.msra.mxu0 0.0
  %1894 = vmatprep.subr.mxu0 0.0
  %1895 = vmatpush1.msra.mxu0 0.0
  %1896 = vmatprep.subr.mxu0 0.0
  %1897 = vmatpush1.msra.mxu0 0.0
  %1898 = vmatprep.subr.mxu0 0.0
  %1899 = vmatpush1.msra.mxu0 0.0
  %1900 = vmatprep.subr.mxu0 0.0
  %1901 = vmatpush1.msra.mxu0 0.0
  %1902 = vmatprep.subr.mxu0 0.0
  %1903 = vmatpush1.msra.mxu0 0.0
  %1904 = vmatprep.subr.mxu0 0.0
  %1905 = vmatpush1.msra.mxu0 0.0
  %1906 = vmatprep.subr.mxu0 0.0
  %1907 = vmatpush1.msra.mxu0 0.0
  %1908 = vmatprep.subr.mxu0 0.0
  %1909 = vmatpush1.msra.mxu0 0.0
  %1910 = vmatprep.subr.mxu0 0.0
  %1911 = vmatpush1.msra.mxu0 0.0
  %1912 = vmatprep.subr.mxu0 0.0
  %1913 = vmatpush1.msra.mxu0 0.0
  %1914 = vmatprep.subr.mxu0 0.0
  %1915 = vmatpush1.msra.mxu0 0.0
  %1916 = vmatprep.subr.mxu0 0.0
  %1917 = vmatpush1.msra.mxu0 0.0
  %1918 = vmatprep.subr.mxu0 0.0
  %1919 = vmatpush1.msra.mxu0 0.0
  %1920 = vmatprep.subr.mxu0 0.0
  %1921 = vmatpush1.msra.mxu0 0.0
  %1922 = vmatprep.subr.mxu0 0.0
  %1923 = vmatpush1.msra.mxu0 %v1849
  %1924 = vmatprep.subr.mxu0 0.0
  %1925 = vmatpush2.msra.mxu0 0.0
  %1926 = vmatprep.subr.mxu0 0.0
  %1927 = vmatpush2.msra.mxu0 0.0
  %1928 = vmatprep.subr.mxu0 0.0
  %1929 = vmatpush2.msra.mxu0 0.0
  %1930 = vmatprep.subr.mxu0 0.0
  %1931 = vmatpush2.msra.mxu0 0.0
  %1932 = vmatprep.subr.mxu0 0.0
  %1933 = vmatpush2.msra.mxu0 0.0
  %1934 = vmatprep.subr.mxu0 0.0
  %1935 = vmatpush2.msra.mxu0 0.0
  %1936 = vmatprep.subr.mxu0 0.0
  %1937 = vmatpush2.msra.mxu0 0.0
  %1938 = vmatprep.subr.mxu0 0.0
  %1939 = vmatpush2.msra.mxu0 0.0
  %1940 = vmatprep.subr.mxu0 0.0
  %1941 = vmatpush2.msra.mxu0 0.0
  %1942 = vmatprep.subr.mxu0 0.0
  %1943 = vmatpush2.msra.mxu0 0.0
  %1944 = vmatprep.subr.mxu0 0.0
  %1945 = vmatpush2.msra.mxu0 0.0
  %1946 = vmatprep.subr.mxu0 0.0
  %1947 = vmatpush2.msra.mxu0 0.0
  %1948 = vmatprep.subr.mxu0 0.0
  %1949 = vmatpush2.msra.mxu0 0.0
  %1950 = vmatprep.subr.mxu0 0.0
  %1951 = vmatpush2.msra.mxu0 0.0
  %1952 = vmatprep.subr.mxu0 0.0
  %1953 = vmatpush2.msra.mxu0 0.0
  %1954 = vmatprep.subr.mxu0 0.0
  %1955 = vmatpush2.msra.mxu0 0.0
  %1956 = vmatprep.mubr.f32.mxu0 0.0
  %1957 = vmatmul.mubr.f32.gmra.mxu0 %v1881
  %v1958 = vpop.f32.mrf.mxu0
  %v1959 = vadd.f32 %v1863, %v1958
  %v1960 = vpop.f32.mrf.mxu0
  %1961 = vmatprep.mubr.f32.mxu0 0.0
  %1962 = vmatmul.mubr.f32.gmra.mxu0 %v1884
  %v1963 = vpop.f32.mrf.mxu0
  %v1964 = vadd.f32 %v1868, %v1963
  %v1965 = vpop.f32.mrf.mxu0
  %1966 = vmatprep.mubr.f32.mxu0 0.0
  %1967 = vmatmul.mubr.f32.gmra.mxu0 %v1887
  %v1968 = vpop.f32.mrf.mxu0
  %v1969 = vadd.f32 %v1873, %v1968
  %v1970 = vpop.f32.mrf.mxu0
  %1971 = vmatprep.mubr.f32.mxu0 0.0
  %1972 = vmatmul.mubr.f32.gmra.mxu0 %v1890
  %v1973 = vpop.f32.mrf.mxu0
  %v1974 = vadd.f32 %v1878, %v1973
  %v1975 = vpop.f32.mrf.mxu0
  %1976 = vdwg.mxu0
  %v1977 = vmax.f32 %v1959, 0.0
  %v1978 = vmax.f32 %v1964, 0.0
  %v1979 = vmax.f32 %v1969, 0.0
  %v1980 = vmax.f32 %v1974, 0.0
  %s1981 = scalar_lea.vmem %s7, 96
  %v1982 = vld [vmem:[%s1981] sm:$0xff]
  %v1983 = vld [vmem:[%s1981 + $0x8] sm:$0xff]
  %v1984 = vld [vmem:[%s1981 + $0x10] sm:$0xff]
  %v1985 = vld [vmem:[%s1981 + $0x18] sm:$0xff]
  %s1986 = scalar_lea.vmem %s8, 96
  %v1987 = vld [vmem:[%s1986] sm:$0xff]
  %v1988 = vld [vmem:[%s1986 + $0x8] sm:$0xff]
  %v1989 = vld [vmem:[%s1986 + $0x10] sm:$0xff]
  %v1990 = vld [vmem:[%s1986 + $0x18] sm:$0xff]
  %1992 = vset.pattern.permute.xlu0 0
  %1993 = vperm.xlu0 %1992, %v1987
  %v1994 = vpop.permute.xlu0 %1993
  %1997 = vset.pattern.permute.xlu0 0
  %1998 = vperm.xlu0 %1997, %v1988
  %v1999 = vpop.permute.xlu0 %1998
  %2002 = vset.pattern.permute.xlu0 0
  %2003 = vperm.xlu0 %2002, %v1989
  %v2004 = vpop.permute.xlu0 %2003
  %2007 = vset.pattern.permute.xlu0 0
  %2008 = vperm.xlu0 %2007, %v1990
  %v2009 = vpop.permute.xlu0 %2008
  %v2012 = vsel %vm437, %v1982, 0
  %v2015 = vsel %vm437, %v1983, 0
  %v2018 = vsel %vm437, %v1984, 0
  %v2021 = vsel %vm437, %v1985, 0
  %2023 = vmatprep.subr.mxu0 0.0
  %2024 = vmatpush1.msra.mxu0 0.0
  %2025 = vmatprep.subr.mxu0 0.0
  %2026 = vmatpush1.msra.mxu0 0.0
  %2027 = vmatprep.subr.mxu0 0.0
  %2028 = vmatpush1.msra.mxu0 0.0
  %2029 = vmatprep.subr.mxu0 0.0
  %2030 = vmatpush1.msra.mxu0 0.0
  %2031 = vmatprep.subr.mxu0 0.0
  %2032 = vmatpush1.msra.mxu0 0.0
  %2033 = vmatprep.subr.mxu0 0.0
  %2034 = vmatpush1.msra.mxu0 0.0
  %2035 = vmatprep.subr.mxu0 0.0
  %2036 = vmatpush1.msra.mxu0 0.0
  %2037 = vmatprep.subr.mxu0 0.0
  %2038 = vmatpush1.msra.mxu0 0.0
  %2039 = vmatprep.subr.mxu0 0.0
  %2040 = vmatpush1.msra.mxu0 0.0
  %2041 = vmatprep.subr.mxu0 0.0
  %2042 = vmatpush1.msra.mxu0 0.0
  %2043 = vmatprep.subr.mxu0 0.0
  %2044 = vmatpush1.msra.mxu0 0.0
  %2045 = vmatprep.subr.mxu0 0.0
  %2046 = vmatpush1.msra.mxu0 0.0
  %2047 = vmatprep.subr.mxu0 0.0
  %2048 = vmatpush1.msra.mxu0 %v1980
  %2049 = vmatprep.subr.mxu0 0.0
  %2050 = vmatpush1.msra.mxu0 %v1979
  %2051 = vmatprep.subr.mxu0 0.0
  %2052 = vmatpush1.msra.mxu0 %v1978
  %2053 = vmatprep.subr.mxu0 0.0
  %2054 = vmatpush1.msra.mxu0 %v1977
  %2055 = vmatprep.subr.mxu0 0.0
  %2056 = vmatpush2.msra.mxu0 0.0
  %2057 = vmatprep.subr.mxu0 0.0
  %2058 = vmatpush2.msra.mxu0 0.0
  %2059 = vmatprep.subr.mxu0 0.0
  %2060 = vmatpush2.msra.mxu0 0.0
  %2061 = vmatprep.subr.mxu0 0.0
  %2062 = vmatpush2.msra.mxu0 0.0
  %2063 = vmatprep.subr.mxu0 0.0
  %2064 = vmatpush2.msra.mxu0 0.0
  %2065 = vmatprep.subr.mxu0 0.0
  %2066 = vmatpush2.msra.mxu0 0.0
  %2067 = vmatprep.subr.mxu0 0.0
  %2068 = vmatpush2.msra.mxu0 0.0
  %2069 = vmatprep.subr.mxu0 0.0
  %2070 = vmatpush2.msra.mxu0 0.0
  %2071 = vmatprep.subr.mxu0 0.0
  %2072 = vmatpush2.msra.mxu0 0.0
  %2073 = vmatprep.subr.mxu0 0.0
  %2074 = vmatpush2.msra.mxu0 0.0
  %2075 = vmatprep.subr.mxu0 0.0
  %2076 = vmatpush2.msra.mxu0 0.0
  %2077 = vmatprep.subr.mxu0 0.0
  %2078 = vmatpush2.msra.mxu0 0.0
  %2079 = vmatprep.subr.mxu0 0.0
  %2080 = vmatpush2.msra.mxu0 0.0
  %2081 = vmatprep.subr.mxu0 0.0
  %2082 = vmatpush2.msra.mxu0 0.0
  %2083 = vmatprep.subr.mxu0 0.0
  %2084 = vmatpush2.msra.mxu0 0.0
  %2085 = vmatprep.subr.mxu0 0.0
  %2086 = vmatpush2.msra.mxu0 0.0
  %2087 = vmatprep.mubr.f32.mxu0 0.0
  %2088 = vmatmul.mubr.f32.gmra.mxu0 %v2012
  %v2089 = vpop.f32.mrf.mxu0
  %v2090 = vadd.f32 %v1994, %v2089
  %v2091 = vpop.f32.mrf.mxu0
  %2092 = vmatprep.mubr.f32.mxu0 0.0
  %2093 = vmatmul.mubr.f32.gmra.mxu0 %v2015
  %v2094 = vpop.f32.mrf.mxu0
  %v2095 = vadd.f32 %v1999, %v2094
  %v2096 = vpop.f32.mrf.mxu0
  %2097 = vmatprep.mubr.f32.mxu0 0.0
  %2098 = vmatmul.mubr.f32.gmra.mxu0 %v2018
  %v2099 = vpop.f32.mrf.mxu0
  %v2100 = vadd.f32 %v2004, %v2099
  %v2101 = vpop.f32.mrf.mxu0
  %2102 = vmatprep.mubr.f32.mxu0 0.0
  %2103 = vmatmul.mubr.f32.gmra.mxu0 %v2021
  %v2104 = vpop.f32.mrf.mxu0
  %v2105 = vadd.f32 %v2009, %v2104
  %v2106 = vpop.f32.mrf.mxu0
  %2107 = vdwg.mxu0
  %v2108 = vmax.f32 %v2090, 0.0
  %v2109 = vmax.f32 %v2095, 0.0
  %v2110 = vmax.f32 %v2100, 0.0
  %v2111 = vmax.f32 %v2105, 0.0
  %s2112 = scalar_lea.vmem %s9, 24
  %v2113 = vld [vmem:[%s2112] sm:$0xff]
  %s2114 = scalar_lea.vmem %s10, 24
  %v2115 = vld [vmem:[%s2114] sm:$0xff]
  %2117 = vset.pattern.permute.xlu0 0
  %2118 = vperm.xlu0 %2117, %v2115
  %v2119 = vpop.permute.xlu0 %2118
  %v2122 = vsel %vm437, %v2113, 0
  %2124 = vmatprep.subr.mxu0 0.0
  %2125 = vmatpush1.msra.mxu0 0.0
  %2126 = vmatprep.subr.mxu0 0.0
  %2127 = vmatpush1.msra.mxu0 0.0
  %2128 = vmatprep.subr.mxu0 0.0
  %2129 = vmatpush1.msra.mxu0 0.0
  %2130 = vmatprep.subr.mxu0 0.0
  %2131 = vmatpush1.msra.mxu0 0.0
  %2132 = vmatprep.subr.mxu0 0.0
  %2133 = vmatpush1.msra.mxu0 0.0
  %2134 = vmatprep.subr.mxu0 0.0
  %2135 = vmatpush1.msra.mxu0 0.0
  %2136 = vmatprep.subr.mxu0 0.0
  %2137 = vmatpush1.msra.mxu0 0.0
  %2138 = vmatprep.subr.mxu0 0.0
  %2139 = vmatpush1.msra.mxu0 0.0
  %2140 = vmatprep.subr.mxu0 0.0
  %2141 = vmatpush1.msra.mxu0 0.0
  %2142 = vmatprep.subr.mxu0 0.0
  %2143 = vmatpush1.msra.mxu0 0.0
  %2144 = vmatprep.subr.mxu0 0.0
  %2145 = vmatpush1.msra.mxu0 0.0
  %2146 = vmatprep.subr.mxu0 0.0
  %2147 = vmatpush1.msra.mxu0 0.0
  %2148 = vmatprep.subr.mxu0 0.0
  %2149 = vmatpush1.msra.mxu0 %v2111
  %2150 = vmatprep.subr.mxu0 0.0
  %2151 = vmatpush1.msra.mxu0 %v2110
  %2152 = vmatprep.subr.mxu0 0.0
  %2153 = vmatpush1.msra.mxu0 %v2109
  %2154 = vmatprep.subr.mxu0 0.0
  %2155 = vmatpush1.msra.mxu0 %v2108
  %2156 = vmatprep.subr.mxu0 0.0
  %2157 = vmatpush2.msra.mxu0 0.0
  %2158 = vmatprep.subr.mxu0 0.0
  %2159 = vmatpush2.msra.mxu0 0.0
  %2160 = vmatprep.subr.mxu0 0.0
  %2161 = vmatpush2.msra.mxu0 0.0
  %2162 = vmatprep.subr.mxu0 0.0
  %2163 = vmatpush2.msra.mxu0 0.0
  %2164 = vmatprep.subr.mxu0 0.0
  %2165 = vmatpush2.msra.mxu0 0.0
  %2166 = vmatprep.subr.mxu0 0.0
  %2167 = vmatpush2.msra.mxu0 0.0
  %2168 = vmatprep.subr.mxu0 0.0
  %2169 = vmatpush2.msra.mxu0 0.0
  %2170 = vmatprep.subr.mxu0 0.0
  %2171 = vmatpush2.msra.mxu0 0.0
  %2172 = vmatprep.subr.mxu0 0.0
  %2173 = vmatpush2.msra.mxu0 0.0
  %2174 = vmatprep.subr.mxu0 0.0
  %2175 = vmatpush2.msra.mxu0 0.0
  %2176 = vmatprep.subr.mxu0 0.0
  %2177 = vmatpush2.msra.mxu0 0.0
  %2178 = vmatprep.subr.mxu0 0.0
  %2179 = vmatpush2.msra.mxu0 0.0
  %2180 = vmatprep.subr.mxu0 0.0
  %2181 = vmatpush2.msra.mxu0 0.0
  %2182 = vmatprep.subr.mxu0 0.0
  %2183 = vmatpush2.msra.mxu0 0.0
  %2184 = vmatprep.subr.mxu0 0.0
  %2185 = vmatpush2.msra.mxu0 0.0
  %2186 = vmatprep.subr.mxu0 0.0
  %2187 = vmatpush2.msra.mxu0 0.0
  %2188 = vmatprep.mubr.f32.mxu0 0.0
  %2189 = vmatmul.mubr.f32.gmra.mxu0 %v2122
  %v2190 = vpop.f32.mrf.mxu0
  %v2191 = vadd.f32 %v2119, %v2190
  %v2192 = vpop.f32.mrf.mxu0
  %2193 = vdwg.mxu0
  %v2194 = vadd.f32 %v1759, %v2191
  %s2195 = scalar_lea.vmem %s1, 64
  %v2196 = vld [vmem:[%s2195] sm:$0xff]
  %v2197 = vld [vmem:[%s2195 + $0x8] sm:$0xff]
  %s2198 = scalar_lea.vmem %s2, 64
  %v2199 = vld [vmem:[%s2198] sm:$0xff]
  %v2200 = vld [vmem:[%s2198 + $0x8] sm:$0xff]
  %2202 = vset.pattern.permute.xlu0 0
  %2203 = vperm.xlu0 %2202, %v2199
  %v2204 = vpop.permute.xlu0 %2203
  %2207 = vset.pattern.permute.xlu0 0
  %2208 = vperm.xlu0 %2207, %v2200
  %v2209 = vpop.permute.xlu0 %2208
  %v2212 = vsel %vm68, %v2196, 0
  %v2215 = vsel %vm68, %v2197, 0
  %2217 = vmatprep.subr.mxu0 0.0
  %2218 = vmatpush1.msra.mxu0 0.0
  %2219 = vmatprep.subr.mxu0 0.0
  %2220 = vmatpush1.msra.mxu0 0.0
  %2221 = vmatprep.subr.mxu0 0.0
  %2222 = vmatpush1.msra.mxu0 0.0
  %2223 = vmatprep.subr.mxu0 0.0
  %2224 = vmatpush1.msra.mxu0 0.0
  %2225 = vmatprep.subr.mxu0 0.0
  %2226 = vmatpush1.msra.mxu0 0.0
  %2227 = vmatprep.subr.mxu0 0.0
  %2228 = vmatpush1.msra.mxu0 0.0
  %2229 = vmatprep.subr.mxu0 0.0
  %2230 = vmatpush1.msra.mxu0 0.0
  %2231 = vmatprep.subr.mxu0 0.0
  %2232 = vmatpush1.msra.mxu0 0.0
  %2233 = vmatprep.subr.mxu0 0.0
  %2234 = vmatpush1.msra.mxu0 0.0
  %2235 = vmatprep.subr.mxu0 0.0
  %2236 = vmatpush1.msra.mxu0 0.0
  %2237 = vmatprep.subr.mxu0 0.0
  %2238 = vmatpush1.msra.mxu0 0.0
  %2239 = vmatprep.subr.mxu0 0.0
  %2240 = vmatpush1.msra.mxu0 0.0
  %2241 = vmatprep.subr.mxu0 0.0
  %2242 = vmatpush1.msra.mxu0 0.0
  %2243 = vmatprep.subr.mxu0 0.0
  %2244 = vmatpush1.msra.mxu0 0.0
  %2245 = vmatprep.subr.mxu0 0.0
  %2246 = vmatpush1.msra.mxu0 %v1764
  %2247 = vmatprep.subr.mxu0 0.0
  %2248 = vmatpush1.msra.mxu0 %v2194
  %2249 = vmatprep.subr.mxu0 0.0
  %2250 = vmatpush2.msra.mxu0 0.0
  %2251 = vmatprep.subr.mxu0 0.0
  %2252 = vmatpush2.msra.mxu0 0.0
  %2253 = vmatprep.subr.mxu0 0.0
  %2254 = vmatpush2.msra.mxu0 0.0
  %2255 = vmatprep.subr.mxu0 0.0
  %2256 = vmatpush2.msra.mxu0 0.0
  %2257 = vmatprep.subr.mxu0 0.0
  %2258 = vmatpush2.msra.mxu0 0.0
  %2259 = vmatprep.subr.mxu0 0.0
  %2260 = vmatpush2.msra.mxu0 0.0
  %2261 = vmatprep.subr.mxu0 0.0
  %2262 = vmatpush2.msra.mxu0 0.0
  %2263 = vmatprep.subr.mxu0 0.0
  %2264 = vmatpush2.msra.mxu0 0.0
  %2265 = vmatprep.subr.mxu0 0.0
  %2266 = vmatpush2.msra.mxu0 0.0
  %2267 = vmatprep.subr.mxu0 0.0
  %2268 = vmatpush2.msra.mxu0 0.0
  %2269 = vmatprep.subr.mxu0 0.0
  %2270 = vmatpush2.msra.mxu0 0.0
  %2271 = vmatprep.subr.mxu0 0.0
  %2272 = vmatpush2.msra.mxu0 0.0
  %2273 = vmatprep.subr.mxu0 0.0
  %2274 = vmatpush2.msra.mxu0 0.0
  %2275 = vmatprep.subr.mxu0 0.0
  %2276 = vmatpush2.msra.mxu0 0.0
  %2277 = vmatprep.subr.mxu0 0.0
  %2278 = vmatpush2.msra.mxu0 0.0
  %2279 = vmatprep.subr.mxu0 0.0
  %2280 = vmatpush2.msra.mxu0 0.0
  %2281 = vmatprep.mubr.f32.mxu0 0.0
  %2282 = vmatmul.mubr.f32.gmra.mxu0 %v2212
  %v2283 = vpop.f32.mrf.mxu0
  %v2284 = vadd.f32 %v2204, %v2283
  %v2285 = vpop.f32.mrf.mxu0
  %2286 = vmatprep.mubr.f32.mxu0 0.0
  %2287 = vmatmul.mubr.f32.gmra.mxu0 %v2215
  %v2288 = vpop.f32.mrf.mxu0
  %v2289 = vadd.f32 %v2209, %v2288
  %v2290 = vpop.f32.mrf.mxu0
  %2291 = vdwg.mxu0
  %2292 = vxpose.xlu0.b32.start [1/16] %v2284, 128
  %2293 = vxpose.xlu0.b32.cont [2/16] %v2289, 128
  %2294 = vxpose.xlu0.b32.cont [3/16] 0.0, 128
  %2295 = vxpose.xlu0.b32.cont [4/16] 0.0, 128
  %2296 = vxpose.xlu0.b32.cont [5/16] 0.0, 128
  %2297 = vxpose.xlu0.b32.cont [6/16] 0.0, 128
  %2298 = vxpose.xlu0.b32.cont [7/16] 0.0, 128
  %2299 = vxpose.xlu0.b32.cont [8/16] 0.0, 128
  %2300 = vxpose.xlu0.b32.cont [9/16] 0.0, 128
  %2301 = vxpose.xlu0.b32.cont [10/16] 0.0, 128
  %2302 = vxpose.xlu0.b32.cont [11/16] 0.0, 128
  %2303 = vxpose.xlu0.b32.cont [12/16] 0.0, 128
  %2304 = vxpose.xlu0.b32.cont [13/16] 0.0, 128
  %2305 = vxpose.xlu0.b32.cont [14/16] 0.0, 128
  %2306 = vxpose.xlu0.b32.cont [15/16] 0.0, 128
  %2307 = vxpose.xlu0.b32.end [16/16] 0.0, 128
  %v2308 = vpop.trf.xlu0
  %v2309 = vpop.trf.xlu0
  %v2310 = vpop.trf.xlu0
  %v2311 = vpop.trf.xlu0
  %v2312 = vpop.trf.xlu0
  %v2313 = vpop.trf.xlu0
  %v2314 = vpop.trf.xlu0
  %v2315 = vpop.trf.xlu0
  %v2316 = vpop.trf.xlu0
  %v2317 = vpop.trf.xlu0
  %v2318 = vpop.trf.xlu0
  %v2319 = vpop.trf.xlu0
  %v2320 = vpop.trf.xlu0
  %v2321 = vpop.trf.xlu0
  %v2322 = vpop.trf.xlu0
  %v2323 = vpop.trf.xlu0
  %2324 = vst.msk [vmem:[%s11] sm:$0xff] %vm68, %v2308
  %2325 = vst.msk [vmem:[%s11 + $0x8] sm:$0xff] %vm68, %v2309
  %2326 = vst.msk [vmem:[%s11 + $0x10] sm:$0xff] %vm68, %v2310
  %2327 = vst.msk [vmem:[%s11 + $0x18] sm:$0xff] %vm68, %v2311
  %2328 = vst.msk [vmem:[%s11 + $0x20] sm:$0xff] %vm68, %v2312
  %2329 = vst.msk [vmem:[%s11 + $0x28] sm:$0xff] %vm68, %v2313
  %2330 = vst.msk [vmem:[%s11 + $0x30] sm:$0xff] %vm68, %v2314
  %2331 = vst.msk [vmem:[%s11 + $0x38] sm:$0xff] %vm68, %v2315
  %2332 = vst.msk [vmem:[%s11 + $0x40] sm:$0xff] %vm68, %v2316
  %2333 = vst.msk [vmem:[%s11 + $0x48] sm:$0xff] %vm68, %v2317
  %2334 = vst.msk [vmem:[%s11 + $0x50] sm:$0xff] %vm68, %v2318
  %2335 = vst.msk [vmem:[%s11 + $0x58] sm:$0xff] %vm68, %v2319
  %2336 = vst.msk [vmem:[%s11 + $0x60] sm:$0xff] %vm68, %v2320
  %2337 = vst.msk [vmem:[%s11 + $0x68] sm:$0xff] %vm68, %v2321
  %2338 = vst.msk [vmem:[%s11 + $0x70] sm:$0xff] %vm68, %v2322
  %2339 = vst.msk [vmem:[%s11 + $0x78] sm:$0xff] %vm68, %v2323
  // Predicated region
  $region46: #{volume_preserving_forward.1} parent=0 // pred_check
    _
  $region47: #{volume_preserving_forward.1} parent=0 // pred_check_branch
    %2341 = sbr.rel (0) target = $region49
  $region48: #{volume_preserving_forward.1} parent=0 // pred_region
    _
  $region49: #{volume_preserving_forward.1} parent=0 // pred_fallthru
    _
  // Predicated region
  $region50: #{volume_preserving_forward.1} parent=0 // pred_check
    _
  $region51: #{volume_preserving_forward.1} parent=0 // pred_check_branch
    %2343 = sbr.rel (0) target = $region53
  $region52: #{volume_preserving_forward.1} parent=0 // pred_region
    _
  $region53: #{volume_preserving_forward.1} parent=0 // pred_fallthru
    _

</llo_original>
